<compile_context>
chip_gen: v6e
topology: v6e:2x2x1
jax: 0.10.0
libtpu: 0.0.40
codegen_flags: <defaults>
</compile_context>

<pallas_src>
import math
import functools

import jax
import jax.numpy as jnp
from jax.experimental import pallas as pl
from jax.experimental.pallas import tpu as pltpu


_VMEM_LIMIT = 32 * 1024 * 1024
_GN_BLOCK_CAP = 4 * 1024 * 1024


def _round_up(x, m):
    return (x + m - 1) // m * m


# ------------------------------------------------------------ tiling plans ---
def _kn_plan(K, N):
    """Tile sizes / padded sizes for the (K, N) operand of a matmul."""
    if K <= 4096:                       # no K tiling -> no K padding needed
        tk, Kp = K, K
    else:
        tk = None
        for t in range(2048, 511, -128):
            if K % t == 0:
                tk = t
                break
        if tk is None:
            tk = 512
        Kp = _round_up(K, tk)
    if N <= 1024:                       # single N tile -> no N padding
        tn, Np = N, N
    else:
        tn = None
        for t in (640, 512, 384, 256, 128):
            if N % t == 0:
                tn = t
                break
        if tn is None:
            tn = 128
        Np = _round_up(N, tn)
    return tk, Kp, tn, Np


def _m_plan(M):
    Mp = _round_up(M, 16)
    if Mp <= 1024:
        return Mp, Mp
    for t in (512, 256, 128):
        if Mp % t == 0:
            return t, Mp
    return 256, _round_up(M, 256)


# ------------------------------------------------------------------ matmul ---
def _matmul_kernel(a_ref, b_ref, bias_ref, o_ref, acc_ref):
    kk = pl.program_id(2)

    @pl.when(kk == 0)
    def _():
        acc_ref[...] = jnp.zeros_like(acc_ref)

    acc_ref[...] += jnp.dot(a_ref[...].astype(jnp.bfloat16), b_ref[...],
                            preferred_element_type=jnp.float32)

    @pl.when(kk == pl.num_programs(2) - 1)
    def _():
        o_ref[...] = acc_ref[...] + bias_ref[...]


def _matmul_res_kernel(a_ref, b_ref, bias_ref, r_ref, o_ref, acc_ref):
    kk = pl.program_id(2)

    @pl.when(kk == 0)
    def _():
        acc_ref[...] = jnp.zeros_like(acc_ref)

    acc_ref[...] += jnp.dot(a_ref[...].astype(jnp.bfloat16), b_ref[...],
                            preferred_element_type=jnp.float32)

    @pl.when(kk == pl.num_programs(2) - 1)
    def _():
        o_ref[...] = acc_ref[...] + bias_ref[...] + r_ref[...]


def _matmul_call(a, w_mat, bias, res, K, N):
    """a: (M, K[..Kp]), w_mat: (Kp, Np) bf16, bias: (N,) -> (M, N) f32."""
    M = a.shape[0]
    tk, Kp, tn, Np = _kn_plan(K, N)
    assert w_mat.shape == (Kp, Np), (w_mat.shape, Kp, Np)
    tm, Mp = _m_plan(M)
    if a.shape[0] != Mp or a.shape[1] != Kp:
        a = jnp.pad(a, ((0, Mp - a.shape[0]), (0, Kp - a.shape[1])))
    bias2 = bias.reshape(1, -1).astype(jnp.float32)
    if bias2.shape[1] != Np:
        bias2 = jnp.pad(bias2, ((0, 0), (0, Np - bias2.shape[1])))

    in_specs = [pl.BlockSpec((tm, tk), lambda i, j, kk: (i, kk)),
                pl.BlockSpec((tk, tn), lambda i, j, kk: (kk, j)),
                pl.BlockSpec((1, tn), lambda i, j, kk: (0, j))]
    args = [a, w_mat, bias2]
    if res is not None:
        r = res.astype(jnp.float32)
        if r.shape != (Mp, Np):
            r = jnp.pad(r, ((0, Mp - r.shape[0]), (0, Np - r.shape[1])))
        in_specs.append(pl.BlockSpec((tm, tn), lambda i, j, kk: (i, j)))
        args.append(r)
        kern = _matmul_res_kernel
    else:
        kern = _matmul_kernel

    out = pl.pallas_call(
        kern,
        out_shape=jax.ShapeDtypeStruct((Mp, Np), jnp.float32),
        grid_spec=pltpu.PrefetchScalarGridSpec(
            num_scalar_prefetch=0,
            grid=(Mp // tm, Np // tn, Kp // tk),
            in_specs=in_specs,
            out_specs=pl.BlockSpec((tm, tn), lambda i, j, kk: (i, j)),
            scratch_shapes=[pltpu.VMEM((tm, tn), jnp.float32)]),
        compiler_params=pltpu.CompilerParams(
            dimension_semantics=("parallel", "parallel", "arbitrary"),
            vmem_limit_bytes=_VMEM_LIMIT),
    )(*args)
    if (Mp, Np) != (M, N):
        out = out[:M, :N]
    return out


@functools.partial(jax.jit, static_argnames=("K", "N"))
def _dense_jit(a, w_mat, bias, res, K, N):
    return _matmul_call(a, w_mat, bias, res, K, N)


def dense(a2d, p, res=None):
    return _dense_jit(a2d, p['w_mat'], p['bias'], res, K=p['kin'], N=p['nout'])


# ------------------------------------------------------- fused GeGLU matmul ---
def _geglu_kernel(a_ref, wa_ref, wg_ref, ba_ref, bg_ref, o_ref, acca_ref, accg_ref):
    kk = pl.program_id(2)

    @pl.when(kk == 0)
    def _():
        acca_ref[...] = jnp.zeros_like(acca_ref)
        accg_ref[...] = jnp.zeros_like(accg_ref)

    ab = a_ref[...].astype(jnp.bfloat16)
    acca_ref[...] += jnp.dot(ab, wa_ref[...], preferred_element_type=jnp.float32)
    accg_ref[...] += jnp.dot(ab, wg_ref[...], preferred_element_type=jnp.float32)

    @pl.when(kk == pl.num_programs(2) - 1)
    def _():
        xa = acca_ref[...] + ba_ref[...]
        xg = accg_ref[...] + bg_ref[...]
        gelu = 0.5 * xg * (1.0 + jax.lax.erf(xg * (1.0 / math.sqrt(2.0))))
        o_ref[...] = xa * gelu


@functools.partial(jax.jit, static_argnames=("K", "N"))
def _geglu_jit(a, wa_mat, wg_mat, ba, bg, K, N):
    M = a.shape[0]
    tk, Kp, tn, Np = _kn_plan(K, N)
    tm, Mp = _m_plan(M)
    if a.shape[0] != Mp or a.shape[1] != Kp:
        a = jnp.pad(a, ((0, Mp - a.shape[0]), (0, Kp - a.shape[1])))
    ba2 = ba.reshape(1, -1).astype(jnp.float32)
    bg2 = bg.reshape(1, -1).astype(jnp.float32)
    if ba2.shape[1] != Np:
        ba2 = jnp.pad(ba2, ((0, 0), (0, Np - ba2.shape[1])))
        bg2 = jnp.pad(bg2, ((0, 0), (0, Np - bg2.shape[1])))
    out = pl.pallas_call(
        _geglu_kernel,
        out_shape=jax.ShapeDtypeStruct((Mp, Np), jnp.float32),
        grid_spec=pltpu.PrefetchScalarGridSpec(
            num_scalar_prefetch=0,
            grid=(Mp // tm, Np // tn, Kp // tk),
            in_specs=[pl.BlockSpec((tm, tk), lambda i, j, kk: (i, kk)),
                      pl.BlockSpec((tk, tn), lambda i, j, kk: (kk, j)),
                      pl.BlockSpec((tk, tn), lambda i, j, kk: (kk, j)),
                      pl.BlockSpec((1, tn), lambda i, j, kk: (0, j)),
                      pl.BlockSpec((1, tn), lambda i, j, kk: (0, j))],
            out_specs=pl.BlockSpec((tm, tn), lambda i, j, kk: (i, j)),
            scratch_shapes=[pltpu.VMEM((tm, tn), jnp.float32),
                            pltpu.VMEM((tm, tn), jnp.float32)]),
        compiler_params=pltpu.CompilerParams(
            dimension_semantics=("parallel", "parallel", "arbitrary"),
            vmem_limit_bytes=_VMEM_LIMIT),
    )(a, wa_mat, wg_mat, ba2, bg2)
    if (Mp, Np) != (M, N):
        out = out[:M, :N]
    return out


def geglu_dense(a2d, p):
    return _geglu_jit(a2d, p['wa_mat'], p['wg_mat'], p['ba'], p['bg'],
                      K=p['kin'], N=p['nout'])


# -------------------------------------------------------------------- conv ---
@functools.partial(jax.jit, static_argnames=("k", "stride", "padding", "K", "N"))
def _conv_jit(x, w_mat, bias, extra_bias, res2d, k, stride, padding, K, N):
    """x: (N, H, W, Cin) f32 NHWC -> (N, Ho, Wo, N) f32.  im2col + Pallas matmul."""
    Nb, H, W, Cin = x.shape
    if extra_bias is not None:
        bias = bias + extra_bias.reshape(-1)
    if k == 1 and stride == 1 and padding == 0:
        a = x.reshape(Nb * H * W, Cin)
        Ho, Wo = H, W
    else:
        xb = x.astype(jnp.bfloat16)            # halve im2col HBM traffic
        if padding:
            xb = jnp.pad(xb, ((0, 0), (padding, padding),
                              (padding, padding), (0, 0)))
        Hp, Wp = H + 2 * padding, W + 2 * padding
        Ho = (Hp - k) // stride + 1
        Wo = (Wp - k) // stride + 1
        slabs = []
        for dy in range(k):
            for dx in range(k):
                slabs.append(xb[:, dy:dy + stride * (Ho - 1) + 1:stride,
                                   dx:dx + stride * (Wo - 1) + 1:stride, :])
        a = jnp.concatenate(slabs, axis=-1).reshape(Nb * Ho * Wo, k * k * Cin)
    y = _matmul_call(a, w_mat, bias, res2d, K, N)
    return y.reshape(Nb, Ho, Wo, N)


def conv2d(x, p, stride=1, padding=0, extra_bias=None, res2d=None):
    return _conv_jit(x, p['w_mat'], p['bias'], extra_bias, res2d,
                     k=p['k'], stride=stride, padding=padding,
                     K=p['kin'], N=p['nout'])


# --------------------------------------------------------------- attention ---
def _attention_kernel(q_ref, k_ref, v_ref, o_ref, *, scale, l_valid):
    q = q_ref[0].astype(jnp.bfloat16)          # (nH, S, dh)
    k = k_ref[0].astype(jnp.bfloat16)          # (nH, Lp, dh)
    v = v_ref[0].astype(jnp.bfloat16)
    s = jnp.einsum('hqd,hkd->hqk', q, k,
                   preferred_element_type=jnp.float32) * scale
    if l_valid is not None:
        kidx = jax.lax.broadcasted_iota(jnp.int32, s.shape, 2)
        s = jnp.where(kidx < l_valid, s, -1e30)
    m = jnp.max(s, axis=-1, keepdims=True)
    p = jnp.exp(s - m)
    l = jnp.sum(p, axis=-1, keepdims=True)
    o = jnp.einsum('hqk,hkd->hqd', p.astype(jnp.bfloat16), v,
                   preferred_element_type=jnp.float32)
    o_ref[0] = o * pl.reciprocal(l, approx=True)


@functools.partial(jax.jit, static_argnames=("scale", "l_valid"))
def pallas_attention(q, k, v, scale, l_valid=None):
    """q: (B, nH, S, dh), k/v: (B, nH, Lp, dh) -> (B, nH, S, dh)."""
    B, nH, S, dh = q.shape
    Lp = k.shape[2]
    kern = functools.partial(_attention_kernel, scale=scale, l_valid=l_valid)
    return pl.pallas_call(
        kern,
        out_shape=jax.ShapeDtypeStruct((B, nH, S, dh), jnp.float32),
        grid_spec=pltpu.PrefetchScalarGridSpec(
            num_scalar_prefetch=0,
            grid=(B,),
            in_specs=[pl.BlockSpec((1, nH, S, dh), lambda b: (b, 0, 0, 0)),
                      pl.BlockSpec((1, nH, Lp, dh), lambda b: (b, 0, 0, 0)),
                      pl.BlockSpec((1, nH, Lp, dh), lambda b: (b, 0, 0, 0))],
            out_specs=pl.BlockSpec((1, nH, S, dh), lambda b: (b, 0, 0, 0))),
        compiler_params=pltpu.CompilerParams(
            dimension_semantics=("parallel",),
            vmem_limit_bytes=_VMEM_LIMIT),
    )(q, k, v)


# --------------------------------------------------------------- groupnorm ---
def _groupnorm_kernel(x_ref, m_ref, mt_ref, w_ref, b_ref, o_ref, *, eps, denom, silu):
    x = x_ref[0]                                               # (HW, Cb) f32
    s1 = jnp.sum(x, axis=0, keepdims=True)                     # (1, Cb)
    gmean = jnp.dot(s1, m_ref[...],
                    preferred_element_type=jnp.float32) * (1.0 / denom)  # (1, 128)
    mean_c = jnp.dot(gmean, mt_ref[...], preferred_element_type=jnp.float32)
    d = x - mean_c
    s2 = jnp.sum(d * d, axis=0, keepdims=True)
    gvar = jnp.dot(s2, m_ref[...],
                   preferred_element_type=jnp.float32) * (1.0 / denom)
    inv_c = jnp.dot(jax.lax.rsqrt(gvar + eps), mt_ref[...],
                    preferred_element_type=jnp.float32)
    y = d * inv_c * w_ref[...] + b_ref[...]
    if silu:
        y = y * jax.nn.sigmoid(y)
    o_ref[0] = y


@functools.partial(jax.jit, static_argnames=("eps", "silu"))
def pallas_groupnorm(x, w, b, m, mt, eps, silu):
    """x: (N, H, W, C) NHWC; 32 groups; per-channel affine; optional fused SiLU."""
    N, H, W, C = x.shape
    HW = H * W
    Cg = C // 32
    xr = x.reshape(N, HW, C)
    # chunk over whole groups (lane-aligned) to bound per-step VMEM (v7x).
    valid = [1] + [d for d in (2, 4, 8, 16)
                   if C % d == 0 and (C // d) % 128 == 0]
    n_chunks = valid[-1]
    for d in valid:
        if HW * (C // d) * 4 <= _GN_BLOCK_CAP:
            n_chunks = d
            break
    Cb = C // n_chunks
    out = pl.pallas_call(
        functools.partial(_groupnorm_kernel, eps=eps,
                          denom=float(HW * Cg), silu=silu),
        out_shape=jax.ShapeDtypeStruct((N, HW, C), jnp.float32),
        grid_spec=pltpu.PrefetchScalarGridSpec(
            num_scalar_prefetch=0,
            grid=(N, n_chunks),
            in_specs=[pl.BlockSpec((1, HW, Cb), lambda n, c: (n, 0, c)),
                      pl.BlockSpec((Cb, 128), lambda n, c: (c, 0)),
                      pl.BlockSpec((128, Cb), lambda n, c: (0, c)),
                      pl.BlockSpec((1, Cb), lambda n, c: (0, c)),
                      pl.BlockSpec((1, Cb), lambda n, c: (0, c))],
            out_specs=pl.BlockSpec((1, HW, Cb), lambda n, c: (n, 0, c))),
        compiler_params=pltpu.CompilerParams(
            dimension_semantics=("parallel", "parallel"),
            vmem_limit_bytes=_VMEM_LIMIT),
    )(xr, m, mt, w, b)
    return out.reshape(N, H, W, C)


def groupnorm(x, p, eps, silu):
    return pallas_groupnorm(x, p['w'], p['b'], p['m'], p['mt'], eps=eps, silu=silu)


# --------------------------------------------------------------- layernorm ---
def _layernorm_kernel(x_ref, w_ref, b_ref, o_ref, *, eps):
    x = x_ref[...]
    mean = jnp.mean(x, axis=-1, keepdims=True)
    d = x - mean
    var = jnp.mean(d * d, axis=-1, keepdims=True)
    o_ref[...] = d * jax.lax.rsqrt(var + eps) * w_ref[...] + b_ref[...]


@functools.partial(jax.jit, static_argnames=("eps",))
def pallas_layernorm(x, w, b, eps=1e-5):
    B, S, C = x.shape
    R = B * S
    x2 = x.reshape(R, C)
    Rp = _round_up(R, 8)
    if Rp != R:
        x2 = jnp.pad(x2, ((0, Rp - R), (0, 0)))
    if Rp <= 512:
        tr = Rp
    else:
        tr = 8
        for t in (512, 256, 128, 64, 32, 16, 8):
            if Rp % t == 0:
                tr = t
                break
    out = pl.pallas_call(
        functools.partial(_layernorm_kernel, eps=eps),
        out_shape=jax.ShapeDtypeStruct((Rp, C), jnp.float32),
        grid_spec=pltpu.PrefetchScalarGridSpec(
            num_scalar_prefetch=0,
            grid=(Rp // tr,),
            in_specs=[pl.BlockSpec((tr, C), lambda i: (i, 0)),
                      pl.BlockSpec((1, C), lambda i: (0, 0)),
                      pl.BlockSpec((1, C), lambda i: (0, 0))],
            out_specs=pl.BlockSpec((tr, C), lambda i: (i, 0))),
        compiler_params=pltpu.CompilerParams(
            dimension_semantics=("parallel",),
            vmem_limit_bytes=_VMEM_LIMIT),
    )(x2, w, b)
    return out[:R].reshape(B, S, C)


# ------------------------------------------------------------------- glue ---
def self_attention(x, p, n_head, res2d):
    B, S, C = x.shape
    dh = C // n_head
    qkv = dense(x.reshape(B * S, C), p['in_proj'])              # (B*S, 3C)
    qkv = qkv.reshape(B, S, 3, n_head, dh).transpose(2, 0, 3, 1, 4)
    o = pallas_attention(qkv[0], qkv[1], qkv[2], scale=1.0 / math.sqrt(dh))
    o2 = o.transpose(0, 2, 1, 3).reshape(B * S, C)
    return dense(o2, p['out_proj'], res=res2d).reshape(B, S, C)


def cross_attention(x, context, p, n_head, res2d):
    B, S, C = x.shape
    _, L, Dc = context.shape
    dh = C // n_head
    q = dense(x.reshape(B * S, C), p['q']).reshape(B, S, n_head, dh).transpose(0, 2, 1, 3)
    k = dense(context.reshape(B * L, Dc), p['k']).reshape(B, L, n_head, dh).transpose(0, 2, 1, 3)
    v = dense(context.reshape(B * L, Dc), p['v']).reshape(B, L, n_head, dh).transpose(0, 2, 1, 3)
    Lp = _round_up(L, 128)
    l_valid = None
    if Lp != L:
        k = jnp.pad(k, ((0, 0), (0, 0), (0, Lp - L), (0, 0)))
        v = jnp.pad(v, ((0, 0), (0, 0), (0, Lp - L), (0, 0)))
        l_valid = L
    o = pallas_attention(q, k, v, scale=1.0 / math.sqrt(dh), l_valid=l_valid)
    o2 = o.transpose(0, 2, 1, 3).reshape(B * S, C)
    return dense(o2, p['out_proj'], res=res2d).reshape(B, S, C)


def residual_block(feature, time_silu, p):
    N, H, W, Cin = feature.shape
    Cout = p['conv_feat']['nout']
    h = groupnorm(feature, p['gn_feat'], eps=1e-5, silu=True)
    t_proj = dense(time_silu, p['lin_time'])                    # (1, Cout)
    h = conv2d(h, p['conv_feat'], stride=1, padding=1, extra_bias=t_proj)
    h = groupnorm(h, p['gn_merged'], eps=1e-5, silu=True)
    if 'res' in p:
        residue = conv2d(feature, p['res'], stride=1, padding=0)
    else:
        residue = feature
    return conv2d(h, p['conv_merged'], stride=1, padding=1,
                  res2d=residue.reshape(N * H * W, Cout))


def attention_block(x, context, p):
    n_head = p['n_head']
    N, H, W, C = x.shape
    S = H * W
    residue_long = x
    h = groupnorm(x, p['gn'], eps=1e-6, silu=False)
    h = conv2d(h, p['conv_in'], stride=1, padding=0)            # 1x1
    h = h.reshape(N, S, C)

    res = h.reshape(N * S, C)
    hn = pallas_layernorm(h, p['ln1']['w'], p['ln1']['b'])
    h = self_attention(hn, p['attn1'], n_head, res)

    res = h.reshape(N * S, C)
    hn = pallas_layernorm(h, p['ln2']['w'], p['ln2']['b'])
    h = cross_attention(hn, context, p['attn2'], n_head, res)

    res = h.reshape(N * S, C)
    hn = pallas_layernorm(h, p['ln3']['w'], p['ln3']['b'])
    g = geglu_dense(hn.reshape(N * S, C), p['geglu'])           # (N*S, 4C)
    h = dense(g, p['geglu2'], res=res).reshape(N, S, C)

    h = h.reshape(N, H, W, C)
    return conv2d(h, p['conv_out'], stride=1, padding=0,
                  res2d=residue_long.reshape(N * H * W, C))


def upsample(x, p):
    x = jnp.repeat(jnp.repeat(x, 2, axis=1), 2, axis=2)         # nearest x2, NHWC
    return conv2d(x, p, stride=1, padding=1)


# ------------------------------------------------------------- parameters ---
_BASE_KEY = jax.random.PRNGKey(0)
_COUNTER = [0]


def _next_key():
    _COUNTER[0] += 1
    return jax.random.fold_in(_BASE_KEY, _COUNTER[0])


def _prep_weight(w_kn):
    """(K, N) f32 -> padded (Kp, Np) bf16 matching the matmul tiling plan."""
    K, N = w_kn.shape
    _, Kp, _, Np = _kn_plan(K, N)
    if Kp != K or Np != N:
        w_kn = jnp.pad(w_kn, ((0, Kp - K), (0, Np - N)))
    return w_kn.astype(jnp.bfloat16)


def conv_params(cin, cout, k):
    w = 0.02 * jax.random.normal(_next_key(), (cout, cin, k, k), jnp.float32)
    b = 0.02 * jax.random.normal(_next_key(), (cout,), jnp.float32)
    w_kn = w.transpose(2, 3, 1, 0).reshape(k * k * cin, cout)   # (dy,dx,ci) major
    return {'w_mat': _prep_weight(w_kn), 'bias': b,
            'kin': k * k * cin, 'nout': cout, 'k': k, 'cin': cin}


def linear_params(cin, cout, bias=True):
    w = 0.02 * jax.random.normal(_next_key(), (cout, cin), jnp.float32)
    b = (0.02 * jax.random.normal(_next_key(), (cout,), jnp.float32)
         if bias else jnp.zeros((cout,), jnp.float32))
    return {'w_mat': _prep_weight(w.T), 'bias': b, 'kin': cin, 'nout': cout}


def geglu_params(c):
    w = 0.02 * jax.random.normal(_next_key(), (8 * c, c), jnp.float32)
    b = 0.02 * jax.random.normal(_next_key(), (8 * c,), jnp.float32)
    return {'wa_mat': _prep_weight(w[:4 * c].T),
            'wg_mat': _prep_weight(w[4 * c:].T),
            'ba': b[:4 * c], 'bg': b[4 * c:], 'kin': c, 'nout': 4 * c}


def gn_params(c):
    cg = c // 32
    m = jnp.zeros((c, 128), jnp.float32).at[
        jnp.arange(c), jnp.arange(c) // cg].set(1.0)
    return {'w': jnp.ones((1, c), jnp.float32),
            'b': jnp.zeros((1, c), jnp.float32),
            'm': m, 'mt': m.T}


def ln_params(c):
    return {'w': jnp.ones((1, c), jnp.float32),
            'b': jnp.zeros((1, c), jnp.float32)}


def residual_block_params(cin, cout, n_time=1280):
    p = {'gn_feat': gn_params(cin),
         'conv_feat': conv_params(cin, cout, 3),
         'lin_time': linear_params(n_time, cout),
         'gn_merged': gn_params(cout),
         'conv_merged': conv_params(cout, cout, 3)}
    if cin != cout:
        p['res'] = conv_params(cin, cout, 1)
    return p


def attention_block_params(n_head, n_embd, d_context=768):
    c = n_head * n_embd
    return {'n_head': n_head,
            'gn': gn_params(c),
            'conv_in': conv_params(c, c, 1),
            'ln1': ln_params(c),
            'attn1': {'in_proj': linear_params(c, 3 * c, bias=False),
                      'out_proj': linear_params(c, c, bias=True)},
            'ln2': ln_params(c),
            'attn2': {'q': linear_params(c, c, bias=False),
                      'k': linear_params(d_context, c, bias=False),
                      'v': linear_params(d_context, c, bias=False),
                      'out_proj': linear_params(c, c, bias=True)},
            'ln3': ln_params(c),
            'geglu': geglu_params(c),
            'geglu2': linear_params(4 * c, c),
            'conv_out': conv_params(c, c, 1)}


def build_unet_params():
    enc = [
        [('conv', conv_params(4, 320, 3), 1, 1)],
        [('res', residual_block_params(320, 320)), ('attn', attention_block_params(8, 40))],
        [('res', residual_block_params(320, 320)), ('attn', attention_block_params(8, 40))],
        [('conv', conv_params(320, 320, 3), 2, 1)],
        [('res', residual_block_params(320, 640)), ('attn', attention_block_params(8, 80))],
        [('res', residual_block_params(640, 640)), ('attn', attention_block_params(8, 80))],
        [('conv', conv_params(640, 640, 3), 2, 1)],
        [('res', residual_block_params(640, 1280)), ('attn', attention_block_params(8, 160))],
        [('res', residual_block_params(1280, 1280)), ('attn', attention_block_params(8, 160))],
        [('conv', conv_params(1280, 1280, 3), 2, 1)],
        [('res', residual_block_params(1280, 1280))],
        [('res', residual_block_params(1280, 1280))],
    ]
    bottleneck = [('res', residual_block_params(1280, 1280)),
                  ('attn', attention_block_params(8, 160)),
                  ('res', residual_block_params(1280, 1280))]
    dec = [
        [('res', residual_block_params(2560, 1280))],
        [('res', residual_block_params(2560, 1280))],
        [('res', residual_block_params(2560, 1280)), ('up', conv_params(1280, 1280, 3))],
        [('res', residual_block_params(2560, 1280)), ('attn', attention_block_params(8, 160))],
        [('res', residual_block_params(2560, 1280)), ('attn', attention_block_params(8, 160))],
        [('res', residual_block_params(1920, 1280)), ('attn', attention_block_params(8, 160)),
         ('up', conv_params(1280, 1280, 3))],
        [('res', residual_block_params(1920, 640)), ('attn', attention_block_params(8, 80))],
        [('res', residual_block_params(1280, 640)), ('attn', attention_block_params(8, 80))],
        [('res', residual_block_params(960, 640)), ('attn', attention_block_params(8, 80)),
         ('up', conv_params(640, 640, 3))],
        [('res', residual_block_params(960, 320)), ('attn', attention_block_params(8, 40))],
        [('res', residual_block_params(640, 320)), ('attn', attention_block_params(8, 40))],
        [('res', residual_block_params(640, 320)), ('attn', attention_block_params(8, 40))],
    ]
    return {'encoders': enc, 'bottleneck': bottleneck, 'decoders': dec}


# ----------------------------------------------------------------- forward ---
def apply_layer(layer, x, context, time_silu):
    kind = layer[0]
    if kind == 'conv':
        _, p, stride, pad = layer
        return conv2d(x, p, stride=stride, padding=pad)
    if kind == 'res':
        return residual_block(x, time_silu, layer[1])
    if kind == 'attn':
        return attention_block(x, context, layer[1])
    if kind == 'up':
        return upsample(x, layer[1])
    raise ValueError(kind)


def unet_forward(params, x_nchw, context, time):
    x = jnp.transpose(x_nchw, (0, 2, 3, 1))          # NCHW -> NHWC (model edge)
    time_silu = time * jax.nn.sigmoid(time)          # (1, 1280): trivial, done in JAX
    skips = []
    for seq in params['encoders']:
        for layer in seq:
            x = apply_layer(layer, x, context, time_silu)
        skips.append(x)
    for layer in params['bottleneck']:
        x = apply_layer(layer, x, context, time_silu)
    for seq in params['decoders']:
        x = jnp.concatenate((x, skips.pop()), axis=-1)
        for layer in seq:
            x = apply_layer(layer, x, context, time_silu)
    return jnp.transpose(x, (0, 3, 1, 2))            # back to NCHW


if __name__ == "__main__":
    key = jax.random.PRNGKey(0)
    kx, kc, kt = jax.random.split(key, 3)
    # x: latent (Batch, 4, H/8, W/8); context: (Batch, Seq, 768); time: (1, 1280)
    x = jax.random.normal(kx, (1, 4, 16, 16), jnp.float32)
    context = jax.random.normal(kc, (1, 8, 768), jnp.float32)
    time = jax.random.normal(kt, (1, 1280), jnp.float32)

    params = build_unet_params()
    out = unet_forward(params, x, context, time)
    out = jax.block_until_ready(out)
    assert out.shape == (1, 320, 16, 16), out.shape
    assert bool(jnp.all(jnp.isfinite(out)))
    print("KERNEL_OK")
</pallas_src>

<mosaic_0001>
module attributes {stable_mosaic.version = 11 : i64} {
  func.func @_matmul_kernel(%arg0: i32, %arg1: i32, %arg2: i32, %arg3: memref<256x36xbf16, #tpu.memory_space<vmem>>, %arg4: memref<36x320xbf16, #tpu.memory_space<vmem>>, %arg5: memref<1x320xf32, #tpu.memory_space<vmem>>, %arg6: memref<256x320xf32, #tpu.memory_space<vmem>>, %arg7: memref<256x320xf32, #tpu.memory_space<vmem>>) attributes {dimension_semantics = [#tpu.dimension_semantics<parallel>, #tpu.dimension_semantics<parallel>, #tpu.dimension_semantics<arbitrary>], iteration_bounds = array<i64: 1, 1, 1>, scalar_prefetch = 0 : i64, scratch_operands = 1 : i64, tpu.core_type = #tpu.core_type<tc>, window_params = [{transform_indices = @transform_0, window_bounds = array<i64: 256, 36>}, {transform_indices = @transform_1, window_bounds = array<i64: 36, 320>}, {transform_indices = @transform_2, window_bounds = array<i64: 1, 320>}, {transform_indices = @transform_3, window_bounds = array<i64: 256, 320>}]} {
    %c0_i32 = arith.constant 0 : i32
    %0 = arith.cmpi eq, %arg2, %c0_i32 : i32
    %1 = arith.extui %0 : i1 to i32
    %c0_i32_0 = arith.constant 0 : i32
    %2 = arith.cmpi ne, %1, %c0_i32_0 : i32
    scf.if %2 {
      %cst_10 = arith.constant 0.000000e+00 : f32
      %12 = vector.broadcast %cst_10 : f32 to vector<256x320xf32>
      %c0_11 = arith.constant 0 : index
      %c0_12 = arith.constant 0 : index
      %13 = vector.load %arg7[%c0_11, %c0_12] : memref<256x320xf32, #tpu.memory_space<vmem>>, vector<256x320xf32>
      tpu.vector_store %arg7[%c0_11, %c0_12], %12 {strides = array<i32>} : memref<256x320xf32, #tpu.memory_space<vmem>>, vector<256x320xf32>,
    } else {
    }
    %c0 = arith.constant 0 : index
    %c0_1 = arith.constant 0 : index
    %3 = vector.load %arg7[%c0, %c0_1] : memref<256x320xf32, #tpu.memory_space<vmem>>, vector<256x320xf32>
    %c0_2 = arith.constant 0 : index
    %c0_3 = arith.constant 0 : index
    %4 = vector.load %arg3[%c0_2, %c0_3] : memref<256x36xbf16, #tpu.memory_space<vmem>>, vector<256x36xbf16>
    %c0_4 = arith.constant 0 : index
    %c0_5 = arith.constant 0 : index
    %5 = vector.load %arg4[%c0_4, %c0_5] : memref<36x320xbf16, #tpu.memory_space<vmem>>, vector<36x320xbf16>
    %cst = arith.constant dense<0.000000e+00> : vector<256x320xf32>
    %6 = tpu.matmul %4, %5, %cst {dimension_numbers = #tpu.dot_dimension_numbers<[1], [0], [0], [1], [0, 0, 1, 1], [], []>} : vector<256x36xbf16>, vector<36x320xbf16>, vector<256x320xf32> -> vector<256x320xf32>
    %7 = arith.addf %3, %6 : vector<256x320xf32>
    %c0_6 = arith.constant 0 : index
    %c0_7 = arith.constant 0 : index
    %8 = vector.load %arg7[%c0_6, %c0_7] : memref<256x320xf32, #tpu.memory_space<vmem>>, vector<256x320xf32>
    tpu.vector_store %arg7[%c0_6, %c0_7], %7 {strides = array<i32>} : memref<256x320xf32, #tpu.memory_space<vmem>>, vector<256x320xf32>,
    %c0_i32_8 = arith.constant 0 : i32
    %9 = arith.cmpi eq, %arg2, %c0_i32_8 : i32
    %10 = arith.extui %9 : i1 to i32
    %c0_i32_9 = arith.constant 0 : i32
    %11 = arith.cmpi ne, %10, %c0_i32_9 : i32
    scf.if %11 {
      %c0_10 = arith.constant 0 : index
      %c0_11 = arith.constant 0 : index
      %12 = vector.load %arg7[%c0_10, %c0_11] : memref<256x320xf32, #tpu.memory_space<vmem>>, vector<256x320xf32>
      %c0_12 = arith.constant 0 : index
      %c0_13 = arith.constant 0 : index
      %13 = vector.load %arg5[%c0_12, %c0_13] : memref<1x320xf32, #tpu.memory_space<vmem>>, vector<1x320xf32>
      %14 = vector.broadcast %13 : vector<1x320xf32> to vector<256x320xf32>
      %15 = arith.addf %12, %14 : vector<256x320xf32>
      %c0_14 = arith.constant 0 : index
      %c0_15 = arith.constant 0 : index
      %16 = vector.load %arg6[%c0_14, %c0_15] : memref<256x320xf32, #tpu.memory_space<vmem>>, vector<256x320xf32>
      tpu.vector_store %arg6[%c0_14, %c0_15], %15 {strides = array<i32>} : memref<256x320xf32, #tpu.memory_space<vmem>>, vector<256x320xf32>,
    } else {
    }
    return
  }
  func.func @transform_0(%arg0: i32, %arg1: i32, %arg2: i32) -> (i32, i32) {
    %c0_i32 = arith.constant 0 : i32
    return %arg0, %arg2 : i32, i32
  }
  func.func @transform_1(%arg0: i32, %arg1: i32, %arg2: i32) -> (i32, i32) {
    %c0_i32 = arith.constant 0 : i32
    return %arg2, %arg1 : i32, i32
  }
  func.func @transform_2(%arg0: i32, %arg1: i32, %arg2: i32) -> (i32, i32) {
    %c0_i32 = arith.constant 0 : i32
    %c0_i32_0 = arith.constant 0 : i32
    return %c0_i32, %arg1 : i32, i32
  }
  func.func @transform_3(%arg0: i32, %arg1: i32, %arg2: i32) -> (i32, i32) {
    %c0_i32 = arith.constant 0 : i32
    return %arg0, %arg1 : i32, i32
  }
}

</mosaic_0001>

<llo_original>
// kernel: _conv_jit.1
$region0: #{_conv_jit.1}
  #allocation0 [shape = 'u32[]', space=smem, size = 0x4, offset = 0x4, fixed_abs, tag = 'smem constant byte address 0x4 - core index']
  #allocation1 [shape = 'u32[144,128]{1,0:T(1,128)}', space=vmem, size = 0x12000, scoped, tag = 'internal scratch']
  #allocation2 [shape = 'f32[256,320]{1,0:T(8,128)}', space=vmem, size = 0x60000, scoped, tag = 'scratch operand']
  %s0 = inlined_call_operand.vmem [shape: bf16[256,36], index: 0, kind: input, shape index: {}]
  %s1 = inlined_call_operand.vmem [shape: bf16[36,320], index: 1, kind: input, shape index: {}]
  %s2 = inlined_call_operand.vmem [shape: f32[1,320], index: 2, kind: input, shape index: {}]
  %s3 = inlined_call_operand.hbm [shape: f32[256,320], index: 3, kind: output, shape index: {}]
  %s4 = sld [smem:[#allocation0]]
  $region30: #{_conv_jit.1} parent=0
    _
  %s6 = ssub.s32 1, %s4
  %s7 = scalar_select 0, %s6, %s4
  $region1: #{_conv_jit.1} parent=0
    #allocation3 [shape = 'u8[393216]{0}', space=vmem, size = 0x60000, scoped, tag = 'output window, operand 0, single buffered']
    #allocation4 [shape = 's32[1]{0}', space=sflag, size = 0x4, scoped, tag = 'scoped memory for _conv_jit.1']
    %8 = vsyncpa [#allocation4], 0
    // Predicated region
    $region2: #{_conv_jit.1} parent=1 // pred_check
      _
    $region3: #{_conv_jit.1} parent=1 // pred_check_branch
      %10 = sbr.rel (0) target = $region5
    $region4: #{_conv_jit.1} parent=1 // pred_region
      _
    $region5: #{_conv_jit.1} parent=1 // pred_fallthru
      _
    // Predicated region
    $region6: #{_conv_jit.1} parent=1 // pred_check
      _
    $region7: #{_conv_jit.1} parent=1 // pred_check_branch
      %12 = sbr.rel (0) target = $region9
    $region8: #{_conv_jit.1} parent=1 // pred_region
      _
    $region9: #{_conv_jit.1} parent=1 // pred_fallthru
      _
    // Predicated region
    $region10: #{_conv_jit.1} parent=1 // pred_check
      _
    $region11: #{_conv_jit.1} parent=1 // pred_check_branch
      %14 = sbr.rel (0) target = $region13
    $region12: #{_conv_jit.1} parent=1 // pred_region
      _
    $region13: #{_conv_jit.1} parent=1 // pred_fallthru
      _
    %p16 = scmp.eq.s32.totalorder 0, 0
    // Predicated region
    $region14: #{_conv_jit.1} parent=1 // pred_check
      %p17 = pneg %p16
    $region15: #{_conv_jit.1} parent=1 // pred_check_branch
      %19 = sbr.rel (%p17) target = $region17
    $region16: #{_conv_jit.1} parent=1 // pred_region
      %20 = vst [vmem:[#allocation2] sm:$0xff] 0.0
      %21 = vst [vmem:[#allocation2 + $0x8] sm:$0xff] 0.0
      %vm22 = vcmask 523264
      %23 = vst.msk [vmem:[#allocation2 + $0x10] sm:$0xff] %vm22, 0.0
      %24 = vst [vmem:[#allocation2 + $0x18] sm:$0xff] 0.0
      %25 = vst [vmem:[#allocation2 + $0x20] sm:$0xff] 0.0
      %26 = vst.msk [vmem:[#allocation2 + $0x28] sm:$0xff] %vm22, 0.0
      %27 = vst [vmem:[#allocation2 + $0x30] sm:$0xff] 0.0
      %28 = vst [vmem:[#allocation2 + $0x38] sm:$0xff] 0.0
      %29 = vst.msk [vmem:[#allocation2 + $0x40] sm:$0xff] %vm22, 0.0
      %30 = vst [vmem:[#allocation2 + $0x48] sm:$0xff] 0.0
      %31 = vst [vmem:[#allocation2 + $0x50] sm:$0xff] 0.0
      %32 = vst.msk [vmem:[#allocation2 + $0x58] sm:$0xff] %vm22, 0.0
      %33 = vst [vmem:[#allocation2 + $0x60] sm:$0xff] 0.0
      %34 = vst [vmem:[#allocation2 + $0x68] sm:$0xff] 0.0
      %35 = vst.msk [vmem:[#allocation2 + $0x70] sm:$0xff] %vm22, 0.0
      %36 = vst [vmem:[#allocation2 + $0x78] sm:$0xff] 0.0
      %37 = vst [vmem:[#allocation2 + $0x80] sm:$0xff] 0.0
      %38 = vst.msk [vmem:[#allocation2 + $0x88] sm:$0xff] %vm22, 0.0
      %39 = vst [vmem:[#allocation2 + $0x90] sm:$0xff] 0.0
      %40 = vst [vmem:[#allocation2 + $0x98] sm:$0xff] 0.0
      %41 = vst.msk [vmem:[#allocation2 + $0xa0] sm:$0xff] %vm22, 0.0
      %42 = vst [vmem:[#allocation2 + $0xa8] sm:$0xff] 0.0
      %43 = vst [vmem:[#allocation2 + $0xb0] sm:$0xff] 0.0
      %44 = vst.msk [vmem:[#allocation2 + $0xb8] sm:$0xff] %vm22, 0.0
      %45 = vst [vmem:[#allocation2 + $0xc0] sm:$0xff] 0.0
      %46 = vst [vmem:[#allocation2 + $0xc8] sm:$0xff] 0.0
      %47 = vst.msk [vmem:[#allocation2 + $0xd0] sm:$0xff] %vm22, 0.0
      %48 = vst [vmem:[#allocation2 + $0xd8] sm:$0xff] 0.0
      %49 = vst [vmem:[#allocation2 + $0xe0] sm:$0xff] 0.0
      %50 = vst.msk [vmem:[#allocation2 + $0xe8] sm:$0xff] %vm22, 0.0
      %51 = vst [vmem:[#allocation2 + $0xf0] sm:$0xff] 0.0
      %52 = vst [vmem:[#allocation2 + $0xf8] sm:$0xff] 0.0
      %53 = vst.msk [vmem:[#allocation2 + $0x100] sm:$0xff] %vm22, 0.0
      %54 = vst [vmem:[#allocation2 + $0x108] sm:$0xff] 0.0
      %55 = vst [vmem:[#allocation2 + $0x110] sm:$0xff] 0.0
      %56 = vst.msk [vmem:[#allocation2 + $0x118] sm:$0xff] %vm22, 0.0
      %57 = vst [vmem:[#allocation2 + $0x120] sm:$0xff] 0.0
      %58 = vst [vmem:[#allocation2 + $0x128] sm:$0xff] 0.0
      %59 = vst.msk [vmem:[#allocation2 + $0x130] sm:$0xff] %vm22, 0.0
      %60 = vst [vmem:[#allocation2 + $0x138] sm:$0xff] 0.0
      %61 = vst [vmem:[#allocation2 + $0x140] sm:$0xff] 0.0
      %62 = vst.msk [vmem:[#allocation2 + $0x148] sm:$0xff] %vm22, 0.0
      %63 = vst [vmem:[#allocation2 + $0x150] sm:$0xff] 0.0
      %64 = vst [vmem:[#allocation2 + $0x158] sm:$0xff] 0.0
      %65 = vst.msk [vmem:[#allocation2 + $0x160] sm:$0xff] %vm22, 0.0
      %66 = vst [vmem:[#allocation2 + $0x168] sm:$0xff] 0.0
      %67 = vst [vmem:[#allocation2 + $0x170] sm:$0xff] 0.0
      %68 = vst.msk [vmem:[#allocation2 + $0x178] sm:$0xff] %vm22, 0.0
      %69 = vst [vmem:[#allocation2 + $0x180] sm:$0xff] 0.0
      %70 = vst [vmem:[#allocation2 + $0x188] sm:$0xff] 0.0
      %71 = vst.msk [vmem:[#allocation2 + $0x190] sm:$0xff] %vm22, 0.0
      %72 = vst [vmem:[#allocation2 + $0x198] sm:$0xff] 0.0
      %73 = vst [vmem:[#allocation2 + $0x1a0] sm:$0xff] 0.0
      %74 = vst.msk [vmem:[#allocation2 + $0x1a8] sm:$0xff] %vm22, 0.0
      %75 = vst [vmem:[#allocation2 + $0x1b0] sm:$0xff] 0.0
      %76 = vst [vmem:[#allocation2 + $0x1b8] sm:$0xff] 0.0
      %77 = vst.msk [vmem:[#allocation2 + $0x1c0] sm:$0xff] %vm22, 0.0
      %78 = vst [vmem:[#allocation2 + $0x1c8] sm:$0xff] 0.0
      %79 = vst [vmem:[#allocation2 + $0x1d0] sm:$0xff] 0.0
      %80 = vst.msk [vmem:[#allocation2 + $0x1d8] sm:$0xff] %vm22, 0.0
      %81 = vst [vmem:[#allocation2 + $0x1e0] sm:$0xff] 0.0
      %82 = vst [vmem:[#allocation2 + $0x1e8] sm:$0xff] 0.0
      %83 = vst.msk [vmem:[#allocation2 + $0x1f0] sm:$0xff] %vm22, 0.0
      %84 = vst [vmem:[#allocation2 + $0x1f8] sm:$0xff] 0.0
      %85 = vst [vmem:[#allocation2 + $0x200] sm:$0xff] 0.0
      %86 = vst.msk [vmem:[#allocation2 + $0x208] sm:$0xff] %vm22, 0.0
      %87 = vst [vmem:[#allocation2 + $0x210] sm:$0xff] 0.0
      %88 = vst [vmem:[#allocation2 + $0x218] sm:$0xff] 0.0
      %89 = vst.msk [vmem:[#allocation2 + $0x220] sm:$0xff] %vm22, 0.0
      %90 = vst [vmem:[#allocation2 + $0x228] sm:$0xff] 0.0
      %91 = vst [vmem:[#allocation2 + $0x230] sm:$0xff] 0.0
      %92 = vst.msk [vmem:[#allocation2 + $0x238] sm:$0xff] %vm22, 0.0
      %93 = vst [vmem:[#allocation2 + $0x240] sm:$0xff] 0.0
      %94 = vst [vmem:[#allocation2 + $0x248] sm:$0xff] 0.0
      %95 = vst.msk [vmem:[#allocation2 + $0x250] sm:$0xff] %vm22, 0.0
      %96 = vst [vmem:[#allocation2 + $0x258] sm:$0xff] 0.0
      %97 = vst [vmem:[#allocation2 + $0x260] sm:$0xff] 0.0
      %98 = vst.msk [vmem:[#allocation2 + $0x268] sm:$0xff] %vm22, 0.0
      %99 = vst [vmem:[#allocation2 + $0x270] sm:$0xff] 0.0
      %100 = vst [vmem:[#allocation2 + $0x278] sm:$0xff] 0.0
      %101 = vst.msk [vmem:[#allocation2 + $0x280] sm:$0xff] %vm22, 0.0
      %102 = vst [vmem:[#allocation2 + $0x288] sm:$0xff] 0.0
      %103 = vst [vmem:[#allocation2 + $0x290] sm:$0xff] 0.0
      %104 = vst.msk [vmem:[#allocation2 + $0x298] sm:$0xff] %vm22, 0.0
      %105 = vst [vmem:[#allocation2 + $0x2a0] sm:$0xff] 0.0
      %106 = vst [vmem:[#allocation2 + $0x2a8] sm:$0xff] 0.0
      %107 = vst.msk [vmem:[#allocation2 + $0x2b0] sm:$0xff] %vm22, 0.0
      %108 = vst [vmem:[#allocation2 + $0x2b8] sm:$0xff] 0.0
      %109 = vst [vmem:[#allocation2 + $0x2c0] sm:$0xff] 0.0
      %110 = vst.msk [vmem:[#allocation2 + $0x2c8] sm:$0xff] %vm22, 0.0
      %111 = vst [vmem:[#allocation2 + $0x2d0] sm:$0xff] 0.0
      %112 = vst [vmem:[#allocation2 + $0x2d8] sm:$0xff] 0.0
      %113 = vst.msk [vmem:[#allocation2 + $0x2e0] sm:$0xff] %vm22, 0.0
      %114 = vst [vmem:[#allocation2 + $0x2e8] sm:$0xff] 0.0
      %115 = vst [vmem:[#allocation2 + $0x2f0] sm:$0xff] 0.0
      %116 = vst.msk [vmem:[#allocation2 + $0x2f8] sm:$0xff] %vm22, 0.0
    $region17: #{_conv_jit.1} parent=1 // pred_fallthru
      _
    %v117 = vld [vmem:[#allocation2] sm:$0xff]
    %v118 = vld [vmem:[#allocation2 + $0x8] sm:$0xff]
    %v119 = vld [vmem:[#allocation2 + $0x10] sm:$0xff]
    %v120 = vld [vmem:[#allocation2 + $0x18] sm:$0xff]
    %v121 = vld [vmem:[#allocation2 + $0x20] sm:$0xff]
    %v122 = vld [vmem:[#allocation2 + $0x28] sm:$0xff]
    %v123 = vld [vmem:[#allocation2 + $0x30] sm:$0xff]
    %v124 = vld [vmem:[#allocation2 + $0x38] sm:$0xff]
    %v125 = vld [vmem:[#allocation2 + $0x40] sm:$0xff]
    %v126 = vld [vmem:[#allocation2 + $0x48] sm:$0xff]
    %v127 = vld [vmem:[#allocation2 + $0x50] sm:$0xff]
    %v128 = vld [vmem:[#allocation2 + $0x58] sm:$0xff]
    %v129 = vld [vmem:[#allocation2 + $0x60] sm:$0xff]
    %v130 = vld [vmem:[#allocation2 + $0x68] sm:$0xff]
    %v131 = vld [vmem:[#allocation2 + $0x70] sm:$0xff]
    %v132 = vld [vmem:[#allocation2 + $0x78] sm:$0xff]
    %v133 = vld [vmem:[#allocation2 + $0x80] sm:$0xff]
    %v134 = vld [vmem:[#allocation2 + $0x88] sm:$0xff]
    %v135 = vld [vmem:[#allocation2 + $0x90] sm:$0xff]
    %v136 = vld [vmem:[#allocation2 + $0x98] sm:$0xff]
    %v137 = vld [vmem:[#allocation2 + $0xa0] sm:$0xff]
    %v138 = vld [vmem:[#allocation2 + $0xa8] sm:$0xff]
    %v139 = vld [vmem:[#allocation2 + $0xb0] sm:$0xff]
    %v140 = vld [vmem:[#allocation2 + $0xb8] sm:$0xff]
    %v141 = vld [vmem:[#allocation2 + $0xc0] sm:$0xff]
    %v142 = vld [vmem:[#allocation2 + $0xc8] sm:$0xff]
    %v143 = vld [vmem:[#allocation2 + $0xd0] sm:$0xff]
    %v144 = vld [vmem:[#allocation2 + $0xd8] sm:$0xff]
    %v145 = vld [vmem:[#allocation2 + $0xe0] sm:$0xff]
    %v146 = vld [vmem:[#allocation2 + $0xe8] sm:$0xff]
    %v147 = vld [vmem:[#allocation2 + $0xf0] sm:$0xff]
    %v148 = vld [vmem:[#allocation2 + $0xf8] sm:$0xff]
    %v149 = vld [vmem:[#allocation2 + $0x100] sm:$0xff]
    %v150 = vld [vmem:[#allocation2 + $0x108] sm:$0xff]
    %v151 = vld [vmem:[#allocation2 + $0x110] sm:$0xff]
    %v152 = vld [vmem:[#allocation2 + $0x118] sm:$0xff]
    %v153 = vld [vmem:[#allocation2 + $0x120] sm:$0xff]
    %v154 = vld [vmem:[#allocation2 + $0x128] sm:$0xff]
    %v155 = vld [vmem:[#allocation2 + $0x130] sm:$0xff]
    %v156 = vld [vmem:[#allocation2 + $0x138] sm:$0xff]
    %v157 = vld [vmem:[#allocation2 + $0x140] sm:$0xff]
    %v158 = vld [vmem:[#allocation2 + $0x148] sm:$0xff]
    %v159 = vld [vmem:[#allocation2 + $0x150] sm:$0xff]
    %v160 = vld [vmem:[#allocation2 + $0x158] sm:$0xff]
    %v161 = vld [vmem:[#allocation2 + $0x160] sm:$0xff]
    %v162 = vld [vmem:[#allocation2 + $0x168] sm:$0xff]
    %v163 = vld [vmem:[#allocation2 + $0x170] sm:$0xff]
    %v164 = vld [vmem:[#allocation2 + $0x178] sm:$0xff]
    %v165 = vld [vmem:[#allocation2 + $0x180] sm:$0xff]
    %v166 = vld [vmem:[#allocation2 + $0x188] sm:$0xff]
    %v167 = vld [vmem:[#allocation2 + $0x190] sm:$0xff]
    %v168 = vld [vmem:[#allocation2 + $0x198] sm:$0xff]
    %v169 = vld [vmem:[#allocation2 + $0x1a0] sm:$0xff]
    %v170 = vld [vmem:[#allocation2 + $0x1a8] sm:$0xff]
    %v171 = vld [vmem:[#allocation2 + $0x1b0] sm:$0xff]
    %v172 = vld [vmem:[#allocation2 + $0x1b8] sm:$0xff]
    %v173 = vld [vmem:[#allocation2 + $0x1c0] sm:$0xff]
    %v174 = vld [vmem:[#allocation2 + $0x1c8] sm:$0xff]
    %v175 = vld [vmem:[#allocation2 + $0x1d0] sm:$0xff]
    %v176 = vld [vmem:[#allocation2 + $0x1d8] sm:$0xff]
    %v177 = vld [vmem:[#allocation2 + $0x1e0] sm:$0xff]
    %v178 = vld [vmem:[#allocation2 + $0x1e8] sm:$0xff]
    %v179 = vld [vmem:[#allocation2 + $0x1f0] sm:$0xff]
    %v180 = vld [vmem:[#allocation2 + $0x1f8] sm:$0xff]
    %v181 = vld [vmem:[#allocation2 + $0x200] sm:$0xff]
    %v182 = vld [vmem:[#allocation2 + $0x208] sm:$0xff]
    %v183 = vld [vmem:[#allocation2 + $0x210] sm:$0xff]
    %v184 = vld [vmem:[#allocation2 + $0x218] sm:$0xff]
    %v185 = vld [vmem:[#allocation2 + $0x220] sm:$0xff]
    %v186 = vld [vmem:[#allocation2 + $0x228] sm:$0xff]
    %v187 = vld [vmem:[#allocation2 + $0x230] sm:$0xff]
    %v188 = vld [vmem:[#allocation2 + $0x238] sm:$0xff]
    %v189 = vld [vmem:[#allocation2 + $0x240] sm:$0xff]
    %v190 = vld [vmem:[#allocation2 + $0x248] sm:$0xff]
    %v191 = vld [vmem:[#allocation2 + $0x250] sm:$0xff]
    %v192 = vld [vmem:[#allocation2 + $0x258] sm:$0xff]
    %v193 = vld [vmem:[#allocation2 + $0x260] sm:$0xff]
    %v194 = vld [vmem:[#allocation2 + $0x268] sm:$0xff]
    %v195 = vld [vmem:[#allocation2 + $0x270] sm:$0xff]
    %v196 = vld [vmem:[#allocation2 + $0x278] sm:$0xff]
    %v197 = vld [vmem:[#allocation2 + $0x280] sm:$0xff]
    %v198 = vld [vmem:[#allocation2 + $0x288] sm:$0xff]
    %v199 = vld [vmem:[#allocation2 + $0x290] sm:$0xff]
    %v200 = vld [vmem:[#allocation2 + $0x298] sm:$0xff]
    %v201 = vld [vmem:[#allocation2 + $0x2a0] sm:$0xff]
    %v202 = vld [vmem:[#allocation2 + $0x2a8] sm:$0xff]
    %v203 = vld [vmem:[#allocation2 + $0x2b0] sm:$0xff]
    %v204 = vld [vmem:[#allocation2 + $0x2b8] sm:$0xff]
    %v205 = vld [vmem:[#allocation2 + $0x2c0] sm:$0xff]
    %v206 = vld [vmem:[#allocation2 + $0x2c8] sm:$0xff]
    %v207 = vld [vmem:[#allocation2 + $0x2d0] sm:$0xff]
    %v208 = vld [vmem:[#allocation2 + $0x2d8] sm:$0xff]
    %v209 = vld [vmem:[#allocation2 + $0x2e0] sm:$0xff]
    %v210 = vld [vmem:[#allocation2 + $0x2e8] sm:$0xff]
    %v211 = vld [vmem:[#allocation2 + $0x2f0] sm:$0xff]
    %v212 = vld [vmem:[#allocation2 + $0x2f8] sm:$0xff]
    %v213 = vld [vmem:[%s0] sm:$0xf]
    %v214 = vld [vmem:[%s0 + $0x4] sm:$0xf]
    %v215 = vld [vmem:[%s0 + $0x8] sm:$0xf]
    %v216 = vld [vmem:[%s0 + $0xc] sm:$0xf]
    %v217 = vld [vmem:[%s0 + $0x10] sm:$0xf]
    %v218 = vld [vmem:[%s0 + $0x14] sm:$0xf]
    %v219 = vld [vmem:[%s0 + $0x18] sm:$0xf]
    %v220 = vld [vmem:[%s0 + $0x1c] sm:$0xf]
    %v221 = vld [vmem:[%s0 + $0x20] sm:$0xf]
    %v222 = vld [vmem:[%s0 + $0x24] sm:$0xf]
    %v223 = vld [vmem:[%s0 + $0x28] sm:$0xf]
    %v224 = vld [vmem:[%s0 + $0x2c] sm:$0xf]
    %v225 = vld [vmem:[%s0 + $0x30] sm:$0xf]
    %v226 = vld [vmem:[%s0 + $0x34] sm:$0xf]
    %v227 = vld [vmem:[%s0 + $0x38] sm:$0xf]
    %v228 = vld [vmem:[%s0 + $0x3c] sm:$0xf]
    %v229 = vld [vmem:[%s0 + $0x40] sm:$0xf]
    %v230 = vld [vmem:[%s0 + $0x44] sm:$0xf]
    %v231 = vld [vmem:[%s0 + $0x48] sm:$0xf]
    %v232 = vld [vmem:[%s0 + $0x4c] sm:$0xf]
    %v233 = vld [vmem:[%s0 + $0x50] sm:$0xf]
    %v234 = vld [vmem:[%s0 + $0x54] sm:$0xf]
    %v235 = vld [vmem:[%s0 + $0x58] sm:$0xf]
    %v236 = vld [vmem:[%s0 + $0x5c] sm:$0xf]
    %v237 = vld [vmem:[%s0 + $0x60] sm:$0xf]
    %v238 = vld [vmem:[%s0 + $0x64] sm:$0xf]
    %v239 = vld [vmem:[%s0 + $0x68] sm:$0xf]
    %v240 = vld [vmem:[%s0 + $0x6c] sm:$0xf]
    %v241 = vld [vmem:[%s0 + $0x70] sm:$0xf]
    %v242 = vld [vmem:[%s0 + $0x74] sm:$0xf]
    %v243 = vld [vmem:[%s0 + $0x78] sm:$0xf]
    %v244 = vld [vmem:[%s0 + $0x7c] sm:$0xf]
    %v245 = vld [vmem:[%s1] sm:$0xff]
    %v246 = vld [vmem:[%s1 + $0x8] sm:$0xf]
    %v247 = vld [vmem:[%s1 + $0xc] sm:$0xff]
    %v248 = vld [vmem:[%s1 + $0x14] sm:$0xf]
    %v249 = vld [vmem:[%s1 + $0x18] sm:$0xff]
    %v250 = vld [vmem:[%s1 + $0x20] sm:$0xf]
    %v251 = vld [vmem:[%s1 + $0x24] sm:$0xff]
    %v252 = vld [vmem:[%s1 + $0x2c] sm:$0xf]
    %v253 = vld [vmem:[%s1 + $0x30] sm:$0x33]
    %v254 = vld [vmem:[%s1 + $0x38] sm:$0x3]
    %v287 = vunpack.c.l.b16 %v213
    %v288 = vunpack.c.l.b16 %v214
    %v289 = vunpack.c.l.b16 %v215
    %v290 = vunpack.c.l.b16 %v216
    %v291 = vunpack.c.l.b16 %v217
    %v292 = vunpack.c.l.b16 %v218
    %v293 = vunpack.c.l.b16 %v219
    %v294 = vunpack.c.l.b16 %v220
    %v295 = vunpack.c.l.b16 %v221
    %v296 = vunpack.c.l.b16 %v222
    %v297 = vunpack.c.l.b16 %v223
    %v298 = vunpack.c.l.b16 %v224
    %v299 = vunpack.c.l.b16 %v225
    %v300 = vunpack.c.l.b16 %v226
    %v301 = vunpack.c.l.b16 %v227
    %v302 = vunpack.c.l.b16 %v228
    %v303 = vunpack.c.l.b16 %v229
    %v304 = vunpack.c.l.b16 %v230
    %v305 = vunpack.c.l.b16 %v231
    %v306 = vunpack.c.l.b16 %v232
    %v307 = vunpack.c.l.b16 %v233
    %v308 = vunpack.c.l.b16 %v234
    %v309 = vunpack.c.l.b16 %v235
    %v310 = vunpack.c.l.b16 %v236
    %v311 = vunpack.c.l.b16 %v237
    %v312 = vunpack.c.l.b16 %v238
    %v313 = vunpack.c.l.b16 %v239
    %v314 = vunpack.c.l.b16 %v240
    %v315 = vunpack.c.l.b16 %v241
    %v316 = vunpack.c.l.b16 %v242
    %v317 = vunpack.c.l.b16 %v243
    %v318 = vunpack.c.l.b16 %v244
    %v319 = vpack.c.b16 %v288, %v287
    %v320 = vpack.c.b16 %v290, %v289
    %v321 = vpack.c.b16 %v292, %v291
    %v322 = vpack.c.b16 %v294, %v293
    %v323 = vpack.c.b16 %v296, %v295
    %v324 = vpack.c.b16 %v298, %v297
    %v325 = vpack.c.b16 %v300, %v299
    %v326 = vpack.c.b16 %v302, %v301
    %v327 = vpack.c.b16 %v304, %v303
    %v328 = vpack.c.b16 %v306, %v305
    %v329 = vpack.c.b16 %v308, %v307
    %v330 = vpack.c.b16 %v310, %v309
    %v331 = vpack.c.b16 %v312, %v311
    %v332 = vpack.c.b16 %v314, %v313
    %v333 = vpack.c.b16 %v316, %v315
    %v334 = vpack.c.b16 %v318, %v317
    %v345 = vunpack.c.l.b16 %v245
    %v346 = vunpack.c.h.b16 %v245
    %v347 = vunpack.c.l.b16 %v246
    %v348 = vunpack.c.l.b16 %v247
    %v349 = vunpack.c.h.b16 %v247
    %v350 = vunpack.c.l.b16 %v248
    %v351 = vunpack.c.l.b16 %v249
    %v352 = vunpack.c.h.b16 %v249
    %v353 = vunpack.c.l.b16 %v250
    %v354 = vunpack.c.l.b16 %v251
    %v355 = vunpack.c.h.b16 %v251
    %v356 = vunpack.c.l.b16 %v252
    %v357 = vunpack.c.l.b16 %v253
    %v358 = vunpack.c.h.b16 %v253
    %v359 = vunpack.c.l.b16 %v254
    %v360 = vpack.c.b16 %v348, %v345
    %v361 = vpack.c.b16 %v349, %v346
    %v362 = vpack.c.b16 %v350, %v347
    %v363 = vpack.c.b16 %v354, %v351
    %v364 = vpack.c.b16 %v355, %v352
    %v365 = vpack.c.b16 %v356, %v353
    %v366 = vpack.c.b16 %v357, %v357
    %v367 = vpack.c.b16 %v358, %v358
    %v368 = vpack.c.b16 %v359, %v359
    %vm375 = vcmask 293888
    %v377 = vsel %vm375, %v319, 0
    %v380 = vsel %vm375, %v320, 0
    %v383 = vsel %vm375, %v321, 0
    %v386 = vsel %vm375, %v322, 0
    %v389 = vsel %vm375, %v323, 0
    %v392 = vsel %vm375, %v324, 0
    %v395 = vsel %vm375, %v325, 0
    %v398 = vsel %vm375, %v326, 0
    %v401 = vsel %vm375, %v327, 0
    %v404 = vsel %vm375, %v328, 0
    %v407 = vsel %vm375, %v329, 0
    %v410 = vsel %vm375, %v330, 0
    %v413 = vsel %vm375, %v331, 0
    %v416 = vsel %vm375, %v332, 0
    %v419 = vsel %vm375, %v333, 0
    %v422 = vsel %vm375, %v334, 0
    %vm424 = vcmask 1041408
    %v426 = vsel %vm424, %v366, 0
    %v429 = vsel %vm424, %v367, 0
    %v432 = vsel %vm424, %v368, 0
    %434 = vmatprep.subr.bf16.mxu0 0
    %435 = vmatpush1.bf16.msra.mxu0 0
    %436 = vmatprep.subr.bf16.mxu0 0
    %437 = vmatpush1.bf16.msra.mxu0 0
    %438 = vmatprep.subr.bf16.mxu0 0
    %439 = vmatpush1.bf16.msra.mxu0 0
    %440 = vmatprep.subr.bf16.mxu0 0
    %441 = vmatpush1.bf16.msra.mxu0 0
    %442 = vmatprep.subr.bf16.mxu0 0
    %443 = vmatpush1.bf16.msra.mxu0 0
    %444 = vmatprep.subr.bf16.mxu0 %v429
    %445 = vmatpush1.bf16.msra.mxu0 %v426
    %446 = vmatprep.subr.bf16.mxu0 %v364
    %447 = vmatpush1.bf16.msra.mxu0 %v363
    %448 = vmatprep.subr.bf16.mxu0 %v361
    %449 = vmatpush1.bf16.msra.mxu0 %v360
    %450 = vmatprep.subr.bf16.mxu0 0
    %451 = vmatpush2.bf16.msra.mxu0 0
    %452 = vmatprep.subr.bf16.mxu0 0
    %453 = vmatpush2.bf16.msra.mxu0 0
    %454 = vmatprep.subr.bf16.mxu0 0
    %455 = vmatpush2.bf16.msra.mxu0 0
    %456 = vmatprep.subr.bf16.mxu0 0
    %457 = vmatpush2.bf16.msra.mxu0 0
    %458 = vmatprep.subr.bf16.mxu0 0
    %459 = vmatpush2.bf16.msra.mxu0 0
    %460 = vmatprep.subr.bf16.mxu0 0
    %461 = vmatpush2.bf16.msra.mxu0 0
    %462 = vmatprep.subr.bf16.mxu0 0
    %463 = vmatpush2.bf16.msra.mxu0 0
    %464 = vmatprep.subr.bf16.mxu0 0
    %465 = vmatpush2.bf16.msra.mxu0 0
    %466 = vmatprep.mubr.bf16.mxu0 0
    %467 = vmatmul.mubr.bf16.gmra.mxu0 %v377
    %v468 = vpop.f32.mrf.mxu0
    %v469 = vadd.f32 0.0, %v468
    %v470 = vpop.f32.mrf.mxu0
    %v471 = vadd.f32 0.0, %v470
    %v472 = vpop.f32.mrf.mxu0
    %v473 = vadd.f32 0.0, %v472
    %v474 = vpop.f32.mrf.mxu0
    %v475 = vadd.f32 0.0, %v474
    %476 = vmatprep.mubr.bf16.mxu0 0
    %477 = vmatmul.mubr.bf16.gmra.mxu0 %v380
    %v478 = vpop.f32.mrf.mxu0
    %v479 = vadd.f32 0.0, %v478
    %v480 = vpop.f32.mrf.mxu0
    %v481 = vadd.f32 0.0, %v480
    %v482 = vpop.f32.mrf.mxu0
    %v483 = vadd.f32 0.0, %v482
    %v484 = vpop.f32.mrf.mxu0
    %v485 = vadd.f32 0.0, %v484
    %486 = vmatprep.mubr.bf16.mxu0 0
    %487 = vmatmul.mubr.bf16.gmra.mxu0 %v383
    %v488 = vpop.f32.mrf.mxu0
    %v489 = vadd.f32 0.0, %v488
    %v490 = vpop.f32.mrf.mxu0
    %v491 = vadd.f32 0.0, %v490
    %v492 = vpop.f32.mrf.mxu0
    %v493 = vadd.f32 0.0, %v492
    %v494 = vpop.f32.mrf.mxu0
    %v495 = vadd.f32 0.0, %v494
    %496 = vmatprep.mubr.bf16.mxu0 0
    %497 = vmatmul.mubr.bf16.gmra.mxu0 %v386
    %v498 = vpop.f32.mrf.mxu0
    %v499 = vadd.f32 0.0, %v498
    %v500 = vpop.f32.mrf.mxu0
    %v501 = vadd.f32 0.0, %v500
    %v502 = vpop.f32.mrf.mxu0
    %v503 = vadd.f32 0.0, %v502
    %v504 = vpop.f32.mrf.mxu0
    %v505 = vadd.f32 0.0, %v504
    %506 = vmatprep.mubr.bf16.mxu0 0
    %507 = vmatmul.mubr.bf16.gmra.mxu0 %v389
    %v508 = vpop.f32.mrf.mxu0
    %v509 = vadd.f32 0.0, %v508
    %v510 = vpop.f32.mrf.mxu0
    %v511 = vadd.f32 0.0, %v510
    %v512 = vpop.f32.mrf.mxu0
    %v513 = vadd.f32 0.0, %v512
    %v514 = vpop.f32.mrf.mxu0
    %v515 = vadd.f32 0.0, %v514
    %516 = vmatprep.mubr.bf16.mxu0 0
    %517 = vmatmul.mubr.bf16.gmra.mxu0 %v392
    %v518 = vpop.f32.mrf.mxu0
    %v519 = vadd.f32 0.0, %v518
    %v520 = vpop.f32.mrf.mxu0
    %v521 = vadd.f32 0.0, %v520
    %v522 = vpop.f32.mrf.mxu0
    %v523 = vadd.f32 0.0, %v522
    %v524 = vpop.f32.mrf.mxu0
    %v525 = vadd.f32 0.0, %v524
    %526 = vmatprep.mubr.bf16.mxu0 0
    %527 = vmatmul.mubr.bf16.gmra.mxu0 %v395
    %v528 = vpop.f32.mrf.mxu0
    %v529 = vadd.f32 0.0, %v528
    %v530 = vpop.f32.mrf.mxu0
    %v531 = vadd.f32 0.0, %v530
    %v532 = vpop.f32.mrf.mxu0
    %v533 = vadd.f32 0.0, %v532
    %v534 = vpop.f32.mrf.mxu0
    %v535 = vadd.f32 0.0, %v534
    %536 = vmatprep.mubr.bf16.mxu0 0
    %537 = vmatmul.mubr.bf16.gmra.mxu0 %v398
    %v538 = vpop.f32.mrf.mxu0
    %v539 = vadd.f32 0.0, %v538
    %v540 = vpop.f32.mrf.mxu0
    %v541 = vadd.f32 0.0, %v540
    %v542 = vpop.f32.mrf.mxu0
    %v543 = vadd.f32 0.0, %v542
    %v544 = vpop.f32.mrf.mxu0
    %v545 = vadd.f32 0.0, %v544
    %546 = vmatprep.mubr.bf16.mxu0 0
    %547 = vmatmul.mubr.bf16.gmra.mxu0 %v401
    %v548 = vpop.f32.mrf.mxu0
    %v549 = vadd.f32 0.0, %v548
    %v550 = vpop.f32.mrf.mxu0
    %v551 = vadd.f32 0.0, %v550
    %v552 = vpop.f32.mrf.mxu0
    %v553 = vadd.f32 0.0, %v552
    %v554 = vpop.f32.mrf.mxu0
    %v555 = vadd.f32 0.0, %v554
    %556 = vmatprep.mubr.bf16.mxu0 0
    %557 = vmatmul.mubr.bf16.gmra.mxu0 %v404
    %v558 = vpop.f32.mrf.mxu0
    %v559 = vadd.f32 0.0, %v558
    %v560 = vpop.f32.mrf.mxu0
    %v561 = vadd.f32 0.0, %v560
    %v562 = vpop.f32.mrf.mxu0
    %v563 = vadd.f32 0.0, %v562
    %v564 = vpop.f32.mrf.mxu0
    %v565 = vadd.f32 0.0, %v564
    %566 = vmatprep.mubr.bf16.mxu0 0
    %567 = vmatmul.mubr.bf16.gmra.mxu0 %v407
    %v568 = vpop.f32.mrf.mxu0
    %v569 = vadd.f32 0.0, %v568
    %v570 = vpop.f32.mrf.mxu0
    %v571 = vadd.f32 0.0, %v570
    %v572 = vpop.f32.mrf.mxu0
    %v573 = vadd.f32 0.0, %v572
    %v574 = vpop.f32.mrf.mxu0
    %v575 = vadd.f32 0.0, %v574
    %576 = vmatprep.mubr.bf16.mxu0 0
    %577 = vmatmul.mubr.bf16.gmra.mxu0 %v410
    %v578 = vpop.f32.mrf.mxu0
    %v579 = vadd.f32 0.0, %v578
    %v580 = vpop.f32.mrf.mxu0
    %v581 = vadd.f32 0.0, %v580
    %v582 = vpop.f32.mrf.mxu0
    %v583 = vadd.f32 0.0, %v582
    %v584 = vpop.f32.mrf.mxu0
    %v585 = vadd.f32 0.0, %v584
    %586 = vmatprep.mubr.bf16.mxu0 0
    %587 = vmatmul.mubr.bf16.gmra.mxu0 %v413
    %v588 = vpop.f32.mrf.mxu0
    %v589 = vadd.f32 0.0, %v588
    %v590 = vpop.f32.mrf.mxu0
    %v591 = vadd.f32 0.0, %v590
    %v592 = vpop.f32.mrf.mxu0
    %v593 = vadd.f32 0.0, %v592
    %v594 = vpop.f32.mrf.mxu0
    %v595 = vadd.f32 0.0, %v594
    %596 = vmatprep.mubr.bf16.mxu0 0
    %597 = vmatmul.mubr.bf16.gmra.mxu0 %v416
    %v598 = vpop.f32.mrf.mxu0
    %v599 = vadd.f32 0.0, %v598
    %v600 = vpop.f32.mrf.mxu0
    %v601 = vadd.f32 0.0, %v600
    %v602 = vpop.f32.mrf.mxu0
    %v603 = vadd.f32 0.0, %v602
    %v604 = vpop.f32.mrf.mxu0
    %v605 = vadd.f32 0.0, %v604
    %606 = vmatprep.mubr.bf16.mxu0 0
    %607 = vmatmul.mubr.bf16.gmra.mxu0 %v419
    %v608 = vpop.f32.mrf.mxu0
    %v609 = vadd.f32 0.0, %v608
    %v610 = vpop.f32.mrf.mxu0
    %v611 = vadd.f32 0.0, %v610
    %v612 = vpop.f32.mrf.mxu0
    %v613 = vadd.f32 0.0, %v612
    %v614 = vpop.f32.mrf.mxu0
    %v615 = vadd.f32 0.0, %v614
    %616 = vmatprep.mubr.bf16.mxu0 0
    %617 = vmatmul.mubr.bf16.gmra.mxu0 %v422
    %v618 = vpop.f32.mrf.mxu0
    %v619 = vadd.f32 0.0, %v618
    %v620 = vpop.f32.mrf.mxu0
    %v621 = vadd.f32 0.0, %v620
    %v622 = vpop.f32.mrf.mxu0
    %v623 = vadd.f32 0.0, %v622
    %v624 = vpop.f32.mrf.mxu0
    %v625 = vadd.f32 0.0, %v624
    %626 = vdwg.mxu0
    %627 = vmatprep.subr.bf16.mxu0 0
    %628 = vmatpush1.bf16.msra.mxu0 0
    %629 = vmatprep.subr.bf16.mxu0 0
    %630 = vmatpush1.bf16.msra.mxu0 0
    %631 = vmatprep.subr.bf16.mxu0 0
    %632 = vmatpush1.bf16.msra.mxu0 0
    %633 = vmatprep.subr.bf16.mxu0 0
    %634 = vmatpush1.bf16.msra.mxu0 0
    %635 = vmatprep.subr.bf16.mxu0 0
    %636 = vmatpush1.bf16.msra.mxu0 0
    %637 = vmatprep.subr.bf16.mxu0 0
    %638 = vmatpush1.bf16.msra.mxu0 %v432
    %639 = vmatprep.subr.bf16.mxu0 0
    %640 = vmatpush1.bf16.msra.mxu0 %v365
    %641 = vmatprep.subr.bf16.mxu0 0
    %642 = vmatpush1.bf16.msra.mxu0 %v362
    %643 = vmatprep.subr.bf16.mxu0 0
    %644 = vmatpush2.bf16.msra.mxu0 0
    %645 = vmatprep.subr.bf16.mxu0 0
    %646 = vmatpush2.bf16.msra.mxu0 0
    %647 = vmatprep.subr.bf16.mxu0 0
    %648 = vmatpush2.bf16.msra.mxu0 0
    %649 = vmatprep.subr.bf16.mxu0 0
    %650 = vmatpush2.bf16.msra.mxu0 0
    %651 = vmatprep.subr.bf16.mxu0 0
    %652 = vmatpush2.bf16.msra.mxu0 0
    %653 = vmatprep.subr.bf16.mxu0 0
    %654 = vmatpush2.bf16.msra.mxu0 0
    %655 = vmatprep.subr.bf16.mxu0 0
    %656 = vmatpush2.bf16.msra.mxu0 0
    %657 = vmatprep.subr.bf16.mxu0 0
    %658 = vmatpush2.bf16.msra.mxu0 0
    %659 = vmatprep.mubr.bf16.mxu0 0
    %660 = vmatmul.mubr.bf16.gmra.mxu0 %v377
    %v661 = vpop.f32.mrf.mxu0
    %v662 = vadd.f32 0.0, %v661
    %v663 = vpop.f32.mrf.mxu0
    %v664 = vpop.f32.mrf.mxu0
    %v665 = vadd.f32 0.0, %v664
    %v666 = vpop.f32.mrf.mxu0
    %667 = vmatprep.mubr.bf16.mxu0 0
    %668 = vmatmul.mubr.bf16.gmra.mxu0 %v380
    %v669 = vpop.f32.mrf.mxu0
    %v670 = vadd.f32 0.0, %v669
    %v671 = vpop.f32.mrf.mxu0
    %v672 = vpop.f32.mrf.mxu0
    %v673 = vadd.f32 0.0, %v672
    %v674 = vpop.f32.mrf.mxu0
    %675 = vmatprep.mubr.bf16.mxu0 0
    %676 = vmatmul.mubr.bf16.gmra.mxu0 %v383
    %v677 = vpop.f32.mrf.mxu0
    %v678 = vadd.f32 0.0, %v677
    %v679 = vpop.f32.mrf.mxu0
    %v680 = vpop.f32.mrf.mxu0
    %v681 = vadd.f32 0.0, %v680
    %v682 = vpop.f32.mrf.mxu0
    %683 = vmatprep.mubr.bf16.mxu0 0
    %684 = vmatmul.mubr.bf16.gmra.mxu0 %v386
    %v685 = vpop.f32.mrf.mxu0
    %v686 = vadd.f32 0.0, %v685
    %v687 = vpop.f32.mrf.mxu0
    %v688 = vpop.f32.mrf.mxu0
    %v689 = vadd.f32 0.0, %v688
    %v690 = vpop.f32.mrf.mxu0
    %691 = vmatprep.mubr.bf16.mxu0 0
    %692 = vmatmul.mubr.bf16.gmra.mxu0 %v389
    %v693 = vpop.f32.mrf.mxu0
    %v694 = vadd.f32 0.0, %v693
    %v695 = vpop.f32.mrf.mxu0
    %v696 = vpop.f32.mrf.mxu0
    %v697 = vadd.f32 0.0, %v696
    %v698 = vpop.f32.mrf.mxu0
    %699 = vmatprep.mubr.bf16.mxu0 0
    %700 = vmatmul.mubr.bf16.gmra.mxu0 %v392
    %v701 = vpop.f32.mrf.mxu0
    %v702 = vadd.f32 0.0, %v701
    %v703 = vpop.f32.mrf.mxu0
    %v704 = vpop.f32.mrf.mxu0
    %v705 = vadd.f32 0.0, %v704
    %v706 = vpop.f32.mrf.mxu0
    %707 = vmatprep.mubr.bf16.mxu0 0
    %708 = vmatmul.mubr.bf16.gmra.mxu0 %v395
    %v709 = vpop.f32.mrf.mxu0
    %v710 = vadd.f32 0.0, %v709
    %v711 = vpop.f32.mrf.mxu0
    %v712 = vpop.f32.mrf.mxu0
    %v713 = vadd.f32 0.0, %v712
    %v714 = vpop.f32.mrf.mxu0
    %715 = vmatprep.mubr.bf16.mxu0 0
    %716 = vmatmul.mubr.bf16.gmra.mxu0 %v398
    %v717 = vpop.f32.mrf.mxu0
    %v718 = vadd.f32 0.0, %v717
    %v719 = vpop.f32.mrf.mxu0
    %v720 = vpop.f32.mrf.mxu0
    %v721 = vadd.f32 0.0, %v720
    %v722 = vpop.f32.mrf.mxu0
    %723 = vmatprep.mubr.bf16.mxu0 0
    %724 = vmatmul.mubr.bf16.gmra.mxu0 %v401
    %v725 = vpop.f32.mrf.mxu0
    %v726 = vadd.f32 0.0, %v725
    %v727 = vpop.f32.mrf.mxu0
    %v728 = vpop.f32.mrf.mxu0
    %v729 = vadd.f32 0.0, %v728
    %v730 = vpop.f32.mrf.mxu0
    %731 = vmatprep.mubr.bf16.mxu0 0
    %732 = vmatmul.mubr.bf16.gmra.mxu0 %v404
    %v733 = vpop.f32.mrf.mxu0
    %v734 = vadd.f32 0.0, %v733
    %v735 = vpop.f32.mrf.mxu0
    %v736 = vpop.f32.mrf.mxu0
    %v737 = vadd.f32 0.0, %v736
    %v738 = vpop.f32.mrf.mxu0
    %739 = vmatprep.mubr.bf16.mxu0 0
    %740 = vmatmul.mubr.bf16.gmra.mxu0 %v407
    %v741 = vpop.f32.mrf.mxu0
    %v742 = vadd.f32 0.0, %v741
    %v743 = vpop.f32.mrf.mxu0
    %v744 = vpop.f32.mrf.mxu0
    %v745 = vadd.f32 0.0, %v744
    %v746 = vpop.f32.mrf.mxu0
    %747 = vmatprep.mubr.bf16.mxu0 0
    %748 = vmatmul.mubr.bf16.gmra.mxu0 %v410
    %v749 = vpop.f32.mrf.mxu0
    %v750 = vadd.f32 0.0, %v749
    %v751 = vpop.f32.mrf.mxu0
    %v752 = vpop.f32.mrf.mxu0
    %v753 = vadd.f32 0.0, %v752
    %v754 = vpop.f32.mrf.mxu0
    %755 = vmatprep.mubr.bf16.mxu0 0
    %756 = vmatmul.mubr.bf16.gmra.mxu0 %v413
    %v757 = vpop.f32.mrf.mxu0
    %v758 = vadd.f32 0.0, %v757
    %v759 = vpop.f32.mrf.mxu0
    %v760 = vpop.f32.mrf.mxu0
    %v761 = vadd.f32 0.0, %v760
    %v762 = vpop.f32.mrf.mxu0
    %763 = vmatprep.mubr.bf16.mxu0 0
    %764 = vmatmul.mubr.bf16.gmra.mxu0 %v416
    %v765 = vpop.f32.mrf.mxu0
    %v766 = vadd.f32 0.0, %v765
    %v767 = vpop.f32.mrf.mxu0
    %v768 = vpop.f32.mrf.mxu0
    %v769 = vadd.f32 0.0, %v768
    %v770 = vpop.f32.mrf.mxu0
    %771 = vmatprep.mubr.bf16.mxu0 0
    %772 = vmatmul.mubr.bf16.gmra.mxu0 %v419
    %v773 = vpop.f32.mrf.mxu0
    %v774 = vadd.f32 0.0, %v773
    %v775 = vpop.f32.mrf.mxu0
    %v776 = vpop.f32.mrf.mxu0
    %v777 = vadd.f32 0.0, %v776
    %v778 = vpop.f32.mrf.mxu0
    %779 = vmatprep.mubr.bf16.mxu0 0
    %780 = vmatmul.mubr.bf16.gmra.mxu0 %v422
    %v781 = vpop.f32.mrf.mxu0
    %v782 = vadd.f32 0.0, %v781
    %v783 = vpop.f32.mrf.mxu0
    %v784 = vpop.f32.mrf.mxu0
    %v785 = vadd.f32 0.0, %v784
    %v786 = vpop.f32.mrf.mxu0
    %787 = vdwg.mxu0
    %v788 = vadd.f32 %v117, %v469
    %v789 = vadd.f32 %v118, %v471
    %v790 = vadd.f32 %v119, %v662
    %v791 = vadd.f32 %v120, %v473
    %v792 = vadd.f32 %v121, %v475
    %v793 = vadd.f32 %v122, %v665
    %v794 = vadd.f32 %v123, %v479
    %v795 = vadd.f32 %v124, %v481
    %v796 = vadd.f32 %v125, %v670
    %v797 = vadd.f32 %v126, %v483
    %v798 = vadd.f32 %v127, %v485
    %v799 = vadd.f32 %v128, %v673
    %v800 = vadd.f32 %v129, %v489
    %v801 = vadd.f32 %v130, %v491
    %v802 = vadd.f32 %v131, %v678
    %v803 = vadd.f32 %v132, %v493
    %v804 = vadd.f32 %v133, %v495
    %v805 = vadd.f32 %v134, %v681
    %v806 = vadd.f32 %v135, %v499
    %v807 = vadd.f32 %v136, %v501
    %v808 = vadd.f32 %v137, %v686
    %v809 = vadd.f32 %v138, %v503
    %v810 = vadd.f32 %v139, %v505
    %v811 = vadd.f32 %v140, %v689
    %v812 = vadd.f32 %v141, %v509
    %v813 = vadd.f32 %v142, %v511
    %v814 = vadd.f32 %v143, %v694
    %v815 = vadd.f32 %v144, %v513
    %v816 = vadd.f32 %v145, %v515
    %v817 = vadd.f32 %v146, %v697
    %v818 = vadd.f32 %v147, %v519
    %v819 = vadd.f32 %v148, %v521
    %v820 = vadd.f32 %v149, %v702
    %v821 = vadd.f32 %v150, %v523
    %v822 = vadd.f32 %v151, %v525
    %v823 = vadd.f32 %v152, %v705
    %v824 = vadd.f32 %v153, %v529
    %v825 = vadd.f32 %v154, %v531
    %v826 = vadd.f32 %v155, %v710
    %v827 = vadd.f32 %v156, %v533
    %v828 = vadd.f32 %v157, %v535
    %v829 = vadd.f32 %v158, %v713
    %v830 = vadd.f32 %v159, %v539
    %v831 = vadd.f32 %v160, %v541
    %v832 = vadd.f32 %v161, %v718
    %v833 = vadd.f32 %v162, %v543
    %v834 = vadd.f32 %v163, %v545
    %v835 = vadd.f32 %v164, %v721
    %v836 = vadd.f32 %v165, %v549
    %v837 = vadd.f32 %v166, %v551
    %v838 = vadd.f32 %v167, %v726
    %v839 = vadd.f32 %v168, %v553
    %v840 = vadd.f32 %v169, %v555
    %v841 = vadd.f32 %v170, %v729
    %v842 = vadd.f32 %v171, %v559
    %v843 = vadd.f32 %v172, %v561
    %v844 = vadd.f32 %v173, %v734
    %v845 = vadd.f32 %v174, %v563
    %v846 = vadd.f32 %v175, %v565
    %v847 = vadd.f32 %v176, %v737
    %v848 = vadd.f32 %v177, %v569
    %v849 = vadd.f32 %v178, %v571
    %v850 = vadd.f32 %v179, %v742
    %v851 = vadd.f32 %v180, %v573
    %v852 = vadd.f32 %v181, %v575
    %v853 = vadd.f32 %v182, %v745
    %v854 = vadd.f32 %v183, %v579
    %v855 = vadd.f32 %v184, %v581
    %v856 = vadd.f32 %v185, %v750
    %v857 = vadd.f32 %v186, %v583
    %v858 = vadd.f32 %v187, %v585
    %v859 = vadd.f32 %v188, %v753
    %v860 = vadd.f32 %v189, %v589
    %v861 = vadd.f32 %v190, %v591
    %v862 = vadd.f32 %v191, %v758
    %v863 = vadd.f32 %v192, %v593
    %v864 = vadd.f32 %v193, %v595
    %v865 = vadd.f32 %v194, %v761
    %v866 = vadd.f32 %v195, %v599
    %v867 = vadd.f32 %v196, %v601
    %v868 = vadd.f32 %v197, %v766
    %v869 = vadd.f32 %v198, %v603
    %v870 = vadd.f32 %v199, %v605
    %v871 = vadd.f32 %v200, %v769
    %v872 = vadd.f32 %v201, %v609
    %v873 = vadd.f32 %v202, %v611
    %v874 = vadd.f32 %v203, %v774
    %v875 = vadd.f32 %v204, %v613
    %v876 = vadd.f32 %v205, %v615
    %v877 = vadd.f32 %v206, %v777
    %v878 = vadd.f32 %v207, %v619
    %v879 = vadd.f32 %v208, %v621
    %v880 = vadd.f32 %v209, %v782
    %v881 = vadd.f32 %v210, %v623
    %v882 = vadd.f32 %v211, %v625
    %v883 = vadd.f32 %v212, %v785
    %884 = vst [vmem:[#allocation2] sm:$0xff] %v788
    %885 = vst [vmem:[#allocation2 + $0x8] sm:$0xff] %v789
    %vm886 = vcmask 523264
    %887 = vst.msk [vmem:[#allocation2 + $0x10] sm:$0xff] %vm886, %v790
    %888 = vst [vmem:[#allocation2 + $0x18] sm:$0xff] %v791
    %889 = vst [vmem:[#allocation2 + $0x20] sm:$0xff] %v792
    %890 = vst.msk [vmem:[#allocation2 + $0x28] sm:$0xff] %vm886, %v793
    %891 = vst [vmem:[#allocation2 + $0x30] sm:$0xff] %v794
    %892 = vst [vmem:[#allocation2 + $0x38] sm:$0xff] %v795
    %893 = vst.msk [vmem:[#allocation2 + $0x40] sm:$0xff] %vm886, %v796
    %894 = vst [vmem:[#allocation2 + $0x48] sm:$0xff] %v797
    %895 = vst [vmem:[#allocation2 + $0x50] sm:$0xff] %v798
    %896 = vst.msk [vmem:[#allocation2 + $0x58] sm:$0xff] %vm886, %v799
    %897 = vst [vmem:[#allocation2 + $0x60] sm:$0xff] %v800
    %898 = vst [vmem:[#allocation2 + $0x68] sm:$0xff] %v801
    %899 = vst.msk [vmem:[#allocation2 + $0x70] sm:$0xff] %vm886, %v802
    %900 = vst [vmem:[#allocation2 + $0x78] sm:$0xff] %v803
    %901 = vst [vmem:[#allocation2 + $0x80] sm:$0xff] %v804
    %902 = vst.msk [vmem:[#allocation2 + $0x88] sm:$0xff] %vm886, %v805
    %903 = vst [vmem:[#allocation2 + $0x90] sm:$0xff] %v806
    %904 = vst [vmem:[#allocation2 + $0x98] sm:$0xff] %v807
    %905 = vst.msk [vmem:[#allocation2 + $0xa0] sm:$0xff] %vm886, %v808
    %906 = vst [vmem:[#allocation2 + $0xa8] sm:$0xff] %v809
    %907 = vst [vmem:[#allocation2 + $0xb0] sm:$0xff] %v810
    %908 = vst.msk [vmem:[#allocation2 + $0xb8] sm:$0xff] %vm886, %v811
    %909 = vst [vmem:[#allocation2 + $0xc0] sm:$0xff] %v812
    %910 = vst [vmem:[#allocation2 + $0xc8] sm:$0xff] %v813
    %911 = vst.msk [vmem:[#allocation2 + $0xd0] sm:$0xff] %vm886, %v814
    %912 = vst [vmem:[#allocation2 + $0xd8] sm:$0xff] %v815
    %913 = vst [vmem:[#allocation2 + $0xe0] sm:$0xff] %v816
    %914 = vst.msk [vmem:[#allocation2 + $0xe8] sm:$0xff] %vm886, %v817
    %915 = vst [vmem:[#allocation2 + $0xf0] sm:$0xff] %v818
    %916 = vst [vmem:[#allocation2 + $0xf8] sm:$0xff] %v819
    %917 = vst.msk [vmem:[#allocation2 + $0x100] sm:$0xff] %vm886, %v820
    %918 = vst [vmem:[#allocation2 + $0x108] sm:$0xff] %v821
    %919 = vst [vmem:[#allocation2 + $0x110] sm:$0xff] %v822
    %920 = vst.msk [vmem:[#allocation2 + $0x118] sm:$0xff] %vm886, %v823
    %921 = vst [vmem:[#allocation2 + $0x120] sm:$0xff] %v824
    %922 = vst [vmem:[#allocation2 + $0x128] sm:$0xff] %v825
    %923 = vst.msk [vmem:[#allocation2 + $0x130] sm:$0xff] %vm886, %v826
    %924 = vst [vmem:[#allocation2 + $0x138] sm:$0xff] %v827
    %925 = vst [vmem:[#allocation2 + $0x140] sm:$0xff] %v828
    %926 = vst.msk [vmem:[#allocation2 + $0x148] sm:$0xff] %vm886, %v829
    %927 = vst [vmem:[#allocation2 + $0x150] sm:$0xff] %v830
    %928 = vst [vmem:[#allocation2 + $0x158] sm:$0xff] %v831
    %929 = vst.msk [vmem:[#allocation2 + $0x160] sm:$0xff] %vm886, %v832
    %930 = vst [vmem:[#allocation2 + $0x168] sm:$0xff] %v833
    %931 = vst [vmem:[#allocation2 + $0x170] sm:$0xff] %v834
    %932 = vst.msk [vmem:[#allocation2 + $0x178] sm:$0xff] %vm886, %v835
    %933 = vst [vmem:[#allocation2 + $0x180] sm:$0xff] %v836
    %934 = vst [vmem:[#allocation2 + $0x188] sm:$0xff] %v837
    %935 = vst.msk [vmem:[#allocation2 + $0x190] sm:$0xff] %vm886, %v838
    %936 = vst [vmem:[#allocation2 + $0x198] sm:$0xff] %v839
    %937 = vst [vmem:[#allocation2 + $0x1a0] sm:$0xff] %v840
    %938 = vst.msk [vmem:[#allocation2 + $0x1a8] sm:$0xff] %vm886, %v841
    %939 = vst [vmem:[#allocation2 + $0x1b0] sm:$0xff] %v842
    %940 = vst [vmem:[#allocation2 + $0x1b8] sm:$0xff] %v843
    %941 = vst.msk [vmem:[#allocation2 + $0x1c0] sm:$0xff] %vm886, %v844
    %942 = vst [vmem:[#allocation2 + $0x1c8] sm:$0xff] %v845
    %943 = vst [vmem:[#allocation2 + $0x1d0] sm:$0xff] %v846
    %944 = vst.msk [vmem:[#allocation2 + $0x1d8] sm:$0xff] %vm886, %v847
    %945 = vst [vmem:[#allocation2 + $0x1e0] sm:$0xff] %v848
    %946 = vst [vmem:[#allocation2 + $0x1e8] sm:$0xff] %v849
    %947 = vst.msk [vmem:[#allocation2 + $0x1f0] sm:$0xff] %vm886, %v850
    %948 = vst [vmem:[#allocation2 + $0x1f8] sm:$0xff] %v851
    %949 = vst [vmem:[#allocation2 + $0x200] sm:$0xff] %v852
    %950 = vst.msk [vmem:[#allocation2 + $0x208] sm:$0xff] %vm886, %v853
    %951 = vst [vmem:[#allocation2 + $0x210] sm:$0xff] %v854
    %952 = vst [vmem:[#allocation2 + $0x218] sm:$0xff] %v855
    %953 = vst.msk [vmem:[#allocation2 + $0x220] sm:$0xff] %vm886, %v856
    %954 = vst [vmem:[#allocation2 + $0x228] sm:$0xff] %v857
    %955 = vst [vmem:[#allocation2 + $0x230] sm:$0xff] %v858
    %956 = vst.msk [vmem:[#allocation2 + $0x238] sm:$0xff] %vm886, %v859
    %957 = vst [vmem:[#allocation2 + $0x240] sm:$0xff] %v860
    %958 = vst [vmem:[#allocation2 + $0x248] sm:$0xff] %v861
    %959 = vst.msk [vmem:[#allocation2 + $0x250] sm:$0xff] %vm886, %v862
    %960 = vst [vmem:[#allocation2 + $0x258] sm:$0xff] %v863
    %961 = vst [vmem:[#allocation2 + $0x260] sm:$0xff] %v864
    %962 = vst.msk [vmem:[#allocation2 + $0x268] sm:$0xff] %vm886, %v865
    %963 = vst [vmem:[#allocation2 + $0x270] sm:$0xff] %v866
    %964 = vst [vmem:[#allocation2 + $0x278] sm:$0xff] %v867
    %965 = vst.msk [vmem:[#allocation2 + $0x280] sm:$0xff] %vm886, %v868
    %966 = vst [vmem:[#allocation2 + $0x288] sm:$0xff] %v869
    %967 = vst [vmem:[#allocation2 + $0x290] sm:$0xff] %v870
    %968 = vst.msk [vmem:[#allocation2 + $0x298] sm:$0xff] %vm886, %v871
    %969 = vst [vmem:[#allocation2 + $0x2a0] sm:$0xff] %v872
    %970 = vst [vmem:[#allocation2 + $0x2a8] sm:$0xff] %v873
    %971 = vst.msk [vmem:[#allocation2 + $0x2b0] sm:$0xff] %vm886, %v874
    %972 = vst [vmem:[#allocation2 + $0x2b8] sm:$0xff] %v875
    %973 = vst [vmem:[#allocation2 + $0x2c0] sm:$0xff] %v876
    %974 = vst.msk [vmem:[#allocation2 + $0x2c8] sm:$0xff] %vm886, %v877
    %975 = vst [vmem:[#allocation2 + $0x2d0] sm:$0xff] %v878
    %976 = vst [vmem:[#allocation2 + $0x2d8] sm:$0xff] %v879
    %977 = vst.msk [vmem:[#allocation2 + $0x2e0] sm:$0xff] %vm886, %v880
    %978 = vst [vmem:[#allocation2 + $0x2e8] sm:$0xff] %v881
    %979 = vst [vmem:[#allocation2 + $0x2f0] sm:$0xff] %v882
    %980 = vst.msk [vmem:[#allocation2 + $0x2f8] sm:$0xff] %vm886, %v883
    // Predicated region
    $region18: #{_conv_jit.1} parent=1 // pred_check
      %p981 = pneg %p16
    $region19: #{_conv_jit.1} parent=1 // pred_check_branch
      %983 = sbr.rel (%p981) target = $region21
    $region20: #{_conv_jit.1} parent=1 // pred_region
      %v984 = vld [vmem:[#allocation2] sm:$0xff]
      %v985 = vld [vmem:[#allocation2 + $0x8] sm:$0xff]
      %v986 = vld [vmem:[#allocation2 + $0x10] sm:$0xff]
      %v987 = vld [vmem:[#allocation2 + $0x18] sm:$0xff]
      %v988 = vld [vmem:[#allocation2 + $0x20] sm:$0xff]
      %v989 = vld [vmem:[#allocation2 + $0x28] sm:$0xff]
      %v990 = vld [vmem:[#allocation2 + $0x30] sm:$0xff]
      %v991 = vld [vmem:[#allocation2 + $0x38] sm:$0xff]
      %v992 = vld [vmem:[#allocation2 + $0x40] sm:$0xff]
      %v993 = vld [vmem:[#allocation2 + $0x48] sm:$0xff]
      %v994 = vld [vmem:[#allocation2 + $0x50] sm:$0xff]
      %v995 = vld [vmem:[#allocation2 + $0x58] sm:$0xff]
      %v996 = vld [vmem:[#allocation2 + $0x60] sm:$0xff]
      %v997 = vld [vmem:[#allocation2 + $0x68] sm:$0xff]
      %v998 = vld [vmem:[#allocation2 + $0x70] sm:$0xff]
      %v999 = vld [vmem:[#allocation2 + $0x78] sm:$0xff]
      %v1000 = vld [vmem:[#allocation2 + $0x80] sm:$0xff]
      %v1001 = vld [vmem:[#allocation2 + $0x88] sm:$0xff]
      %v1002 = vld [vmem:[#allocation2 + $0x90] sm:$0xff]
      %v1003 = vld [vmem:[#allocation2 + $0x98] sm:$0xff]
      %v1004 = vld [vmem:[#allocation2 + $0xa0] sm:$0xff]
      %v1005 = vld [vmem:[#allocation2 + $0xa8] sm:$0xff]
      %v1006 = vld [vmem:[#allocation2 + $0xb0] sm:$0xff]
      %v1007 = vld [vmem:[#allocation2 + $0xb8] sm:$0xff]
      %v1008 = vld [vmem:[#allocation2 + $0xc0] sm:$0xff]
      %v1009 = vld [vmem:[#allocation2 + $0xc8] sm:$0xff]
      %v1010 = vld [vmem:[#allocation2 + $0xd0] sm:$0xff]
      %v1011 = vld [vmem:[#allocation2 + $0xd8] sm:$0xff]
      %v1012 = vld [vmem:[#allocation2 + $0xe0] sm:$0xff]
      %v1013 = vld [vmem:[#allocation2 + $0xe8] sm:$0xff]
      %v1014 = vld [vmem:[#allocation2 + $0xf0] sm:$0xff]
      %v1015 = vld [vmem:[#allocation2 + $0xf8] sm:$0xff]
      %v1016 = vld [vmem:[#allocation2 + $0x100] sm:$0xff]
      %v1017 = vld [vmem:[#allocation2 + $0x108] sm:$0xff]
      %v1018 = vld [vmem:[#allocation2 + $0x110] sm:$0xff]
      %v1019 = vld [vmem:[#allocation2 + $0x118] sm:$0xff]
      %v1020 = vld [vmem:[#allocation2 + $0x120] sm:$0xff]
      %v1021 = vld [vmem:[#allocation2 + $0x128] sm:$0xff]
      %v1022 = vld [vmem:[#allocation2 + $0x130] sm:$0xff]
      %v1023 = vld [vmem:[#allocation2 + $0x138] sm:$0xff]
      %v1024 = vld [vmem:[#allocation2 + $0x140] sm:$0xff]
      %v1025 = vld [vmem:[#allocation2 + $0x148] sm:$0xff]
      %v1026 = vld [vmem:[#allocation2 + $0x150] sm:$0xff]
      %v1027 = vld [vmem:[#allocation2 + $0x158] sm:$0xff]
      %v1028 = vld [vmem:[#allocation2 + $0x160] sm:$0xff]
      %v1029 = vld [vmem:[#allocation2 + $0x168] sm:$0xff]
      %v1030 = vld [vmem:[#allocation2 + $0x170] sm:$0xff]
      %v1031 = vld [vmem:[#allocation2 + $0x178] sm:$0xff]
      %v1032 = vld [vmem:[#allocation2 + $0x180] sm:$0xff]
      %v1033 = vld [vmem:[#allocation2 + $0x188] sm:$0xff]
      %v1034 = vld [vmem:[#allocation2 + $0x190] sm:$0xff]
      %v1035 = vld [vmem:[#allocation2 + $0x198] sm:$0xff]
      %v1036 = vld [vmem:[#allocation2 + $0x1a0] sm:$0xff]
      %v1037 = vld [vmem:[#allocation2 + $0x1a8] sm:$0xff]
      %v1038 = vld [vmem:[#allocation2 + $0x1b0] sm:$0xff]
      %v1039 = vld [vmem:[#allocation2 + $0x1b8] sm:$0xff]
      %v1040 = vld [vmem:[#allocation2 + $0x1c0] sm:$0xff]
      %v1041 = vld [vmem:[#allocation2 + $0x1c8] sm:$0xff]
      %v1042 = vld [vmem:[#allocation2 + $0x1d0] sm:$0xff]
      %v1043 = vld [vmem:[#allocation2 + $0x1d8] sm:$0xff]
      %v1044 = vld [vmem:[#allocation2 + $0x1e0] sm:$0xff]
      %v1045 = vld [vmem:[#allocation2 + $0x1e8] sm:$0xff]
      %v1046 = vld [vmem:[#allocation2 + $0x1f0] sm:$0xff]
      %v1047 = vld [vmem:[#allocation2 + $0x1f8] sm:$0xff]
      %v1048 = vld [vmem:[#allocation2 + $0x200] sm:$0xff]
      %v1049 = vld [vmem:[#allocation2 + $0x208] sm:$0xff]
      %v1050 = vld [vmem:[#allocation2 + $0x210] sm:$0xff]
      %v1051 = vld [vmem:[#allocation2 + $0x218] sm:$0xff]
      %v1052 = vld [vmem:[#allocation2 + $0x220] sm:$0xff]
      %v1053 = vld [vmem:[#allocation2 + $0x228] sm:$0xff]
      %v1054 = vld [vmem:[#allocation2 + $0x230] sm:$0xff]
      %v1055 = vld [vmem:[#allocation2 + $0x238] sm:$0xff]
      %v1056 = vld [vmem:[#allocation2 + $0x240] sm:$0xff]
      %v1057 = vld [vmem:[#allocation2 + $0x248] sm:$0xff]
      %v1058 = vld [vmem:[#allocation2 + $0x250] sm:$0xff]
      %v1059 = vld [vmem:[#allocation2 + $0x258] sm:$0xff]
      %v1060 = vld [vmem:[#allocation2 + $0x260] sm:$0xff]
      %v1061 = vld [vmem:[#allocation2 + $0x268] sm:$0xff]
      %v1062 = vld [vmem:[#allocation2 + $0x270] sm:$0xff]
      %v1063 = vld [vmem:[#allocation2 + $0x278] sm:$0xff]
      %v1064 = vld [vmem:[#allocation2 + $0x280] sm:$0xff]
      %v1065 = vld [vmem:[#allocation2 + $0x288] sm:$0xff]
      %v1066 = vld [vmem:[#allocation2 + $0x290] sm:$0xff]
      %v1067 = vld [vmem:[#allocation2 + $0x298] sm:$0xff]
      %v1068 = vld [vmem:[#allocation2 + $0x2a0] sm:$0xff]
      %v1069 = vld [vmem:[#allocation2 + $0x2a8] sm:$0xff]
      %v1070 = vld [vmem:[#allocation2 + $0x2b0] sm:$0xff]
      %v1071 = vld [vmem:[#allocation2 + $0x2b8] sm:$0xff]
      %v1072 = vld [vmem:[#allocation2 + $0x2c0] sm:$0xff]
      %v1073 = vld [vmem:[#allocation2 + $0x2c8] sm:$0xff]
      %v1074 = vld [vmem:[#allocation2 + $0x2d0] sm:$0xff]
      %v1075 = vld [vmem:[#allocation2 + $0x2d8] sm:$0xff]
      %v1076 = vld [vmem:[#allocation2 + $0x2e0] sm:$0xff]
      %v1077 = vld [vmem:[#allocation2 + $0x2e8] sm:$0xff]
      %v1078 = vld [vmem:[#allocation2 + $0x2f0] sm:$0xff]
      %v1079 = vld [vmem:[#allocation2 + $0x2f8] sm:$0xff]
      %v1080 = vld [vmem:[%s2] sm:$0x7]
      %v1082 = vlaneseq
      %v1083 = vshrl.u32 %v1082, 7
      %v1084 = vsub.s32 0, %v1083
      %v1085 = vrot.slane %v1080, %v1084
      %v1086 = vlaneseq
      %v1087 = vshrl.u32 %v1086, 7
      %v1088 = vsub.s32 1, %v1087
      %v1089 = vrot.slane %v1080, %v1088
      %v1090 = vlaneseq
      %v1091 = vshrl.u32 %v1090, 7
      %v1092 = vsub.s32 2, %v1091
      %v1093 = vrot.slane %v1080, %v1092
      %v1097 = vadd.f32 %v984, %v1085
      %v1098 = vadd.f32 %v985, %v1089
      %v1099 = vadd.f32 %v986, %v1093
      %v1100 = vadd.f32 %v987, %v1085
      %v1101 = vadd.f32 %v988, %v1089
      %v1102 = vadd.f32 %v989, %v1093
      %v1103 = vadd.f32 %v990, %v1085
      %v1104 = vadd.f32 %v991, %v1089
      %v1105 = vadd.f32 %v992, %v1093
      %v1106 = vadd.f32 %v993, %v1085
      %v1107 = vadd.f32 %v994, %v1089
      %v1108 = vadd.f32 %v995, %v1093
      %v1109 = vadd.f32 %v996, %v1085
      %v1110 = vadd.f32 %v997, %v1089
      %v1111 = vadd.f32 %v998, %v1093
      %v1112 = vadd.f32 %v999, %v1085
      %v1113 = vadd.f32 %v1000, %v1089
      %v1114 = vadd.f32 %v1001, %v1093
      %v1115 = vadd.f32 %v1002, %v1085
      %v1116 = vadd.f32 %v1003, %v1089
      %v1117 = vadd.f32 %v1004, %v1093
      %v1118 = vadd.f32 %v1005, %v1085
      %v1119 = vadd.f32 %v1006, %v1089
      %v1120 = vadd.f32 %v1007, %v1093
      %v1121 = vadd.f32 %v1008, %v1085
      %v1122 = vadd.f32 %v1009, %v1089
      %v1123 = vadd.f32 %v1010, %v1093
      %v1124 = vadd.f32 %v1011, %v1085
      %v1125 = vadd.f32 %v1012, %v1089
      %v1126 = vadd.f32 %v1013, %v1093
      %v1127 = vadd.f32 %v1014, %v1085
      %v1128 = vadd.f32 %v1015, %v1089
      %v1129 = vadd.f32 %v1016, %v1093
      %v1130 = vadd.f32 %v1017, %v1085
      %v1131 = vadd.f32 %v1018, %v1089
      %v1132 = vadd.f32 %v1019, %v1093
      %v1133 = vadd.f32 %v1020, %v1085
      %v1134 = vadd.f32 %v1021, %v1089
      %v1135 = vadd.f32 %v1022, %v1093
      %v1136 = vadd.f32 %v1023, %v1085
      %v1137 = vadd.f32 %v1024, %v1089
      %v1138 = vadd.f32 %v1025, %v1093
      %v1139 = vadd.f32 %v1026, %v1085
      %v1140 = vadd.f32 %v1027, %v1089
      %v1141 = vadd.f32 %v1028, %v1093
      %v1142 = vadd.f32 %v1029, %v1085
      %v1143 = vadd.f32 %v1030, %v1089
      %v1144 = vadd.f32 %v1031, %v1093
      %v1145 = vadd.f32 %v1032, %v1085
      %v1146 = vadd.f32 %v1033, %v1089
      %v1147 = vadd.f32 %v1034, %v1093
      %v1148 = vadd.f32 %v1035, %v1085
      %v1149 = vadd.f32 %v1036, %v1089
      %v1150 = vadd.f32 %v1037, %v1093
      %v1151 = vadd.f32 %v1038, %v1085
      %v1152 = vadd.f32 %v1039, %v1089
      %v1153 = vadd.f32 %v1040, %v1093
      %v1154 = vadd.f32 %v1041, %v1085
      %v1155 = vadd.f32 %v1042, %v1089
      %v1156 = vadd.f32 %v1043, %v1093
      %v1157 = vadd.f32 %v1044, %v1085
      %v1158 = vadd.f32 %v1045, %v1089
      %v1159 = vadd.f32 %v1046, %v1093
      %v1160 = vadd.f32 %v1047, %v1085
      %v1161 = vadd.f32 %v1048, %v1089
      %v1162 = vadd.f32 %v1049, %v1093
      %v1163 = vadd.f32 %v1050, %v1085
      %v1164 = vadd.f32 %v1051, %v1089
      %v1165 = vadd.f32 %v1052, %v1093
      %v1166 = vadd.f32 %v1053, %v1085
      %v1167 = vadd.f32 %v1054, %v1089
      %v1168 = vadd.f32 %v1055, %v1093
      %v1169 = vadd.f32 %v1056, %v1085
      %v1170 = vadd.f32 %v1057, %v1089
      %v1171 = vadd.f32 %v1058, %v1093
      %v1172 = vadd.f32 %v1059, %v1085
      %v1173 = vadd.f32 %v1060, %v1089
      %v1174 = vadd.f32 %v1061, %v1093
      %v1175 = vadd.f32 %v1062, %v1085
      %v1176 = vadd.f32 %v1063, %v1089
      %v1177 = vadd.f32 %v1064, %v1093
      %v1178 = vadd.f32 %v1065, %v1085
      %v1179 = vadd.f32 %v1066, %v1089
      %v1180 = vadd.f32 %v1067, %v1093
      %v1181 = vadd.f32 %v1068, %v1085
      %v1182 = vadd.f32 %v1069, %v1089
      %v1183 = vadd.f32 %v1070, %v1093
      %v1184 = vadd.f32 %v1071, %v1085
      %v1185 = vadd.f32 %v1072, %v1089
      %v1186 = vadd.f32 %v1073, %v1093
      %v1187 = vadd.f32 %v1074, %v1085
      %v1188 = vadd.f32 %v1075, %v1089
      %v1189 = vadd.f32 %v1076, %v1093
      %v1190 = vadd.f32 %v1077, %v1085
      %v1191 = vadd.f32 %v1078, %v1089
      %v1192 = vadd.f32 %v1079, %v1093
      %1193 = vst [vmem:[#allocation3] sm:$0xff] %v1097
      %1194 = vst [vmem:[#allocation3 + $0x8] sm:$0xff] %v1098
      %1195 = vst.msk [vmem:[#allocation3 + $0x10] sm:$0xff] %vm886, %v1099
      %1196 = vst [vmem:[#allocation3 + $0x18] sm:$0xff] %v1100
      %1197 = vst [vmem:[#allocation3 + $0x20] sm:$0xff] %v1101
      %1198 = vst.msk [vmem:[#allocation3 + $0x28] sm:$0xff] %vm886, %v1102
      %1199 = vst [vmem:[#allocation3 + $0x30] sm:$0xff] %v1103
      %1200 = vst [vmem:[#allocation3 + $0x38] sm:$0xff] %v1104
      %1201 = vst.msk [vmem:[#allocation3 + $0x40] sm:$0xff] %vm886, %v1105
      %1202 = vst [vmem:[#allocation3 + $0x48] sm:$0xff] %v1106
      %1203 = vst [vmem:[#allocation3 + $0x50] sm:$0xff] %v1107
      %1204 = vst.msk [vmem:[#allocation3 + $0x58] sm:$0xff] %vm886, %v1108
      %1205 = vst [vmem:[#allocation3 + $0x60] sm:$0xff] %v1109
      %1206 = vst [vmem:[#allocation3 + $0x68] sm:$0xff] %v1110
      %1207 = vst.msk [vmem:[#allocation3 + $0x70] sm:$0xff] %vm886, %v1111
      %1208 = vst [vmem:[#allocation3 + $0x78] sm:$0xff] %v1112
      %1209 = vst [vmem:[#allocation3 + $0x80] sm:$0xff] %v1113
      %1210 = vst.msk [vmem:[#allocation3 + $0x88] sm:$0xff] %vm886, %v1114
      %1211 = vst [vmem:[#allocation3 + $0x90] sm:$0xff] %v1115
      %1212 = vst [vmem:[#allocation3 + $0x98] sm:$0xff] %v1116
      %1213 = vst.msk [vmem:[#allocation3 + $0xa0] sm:$0xff] %vm886, %v1117
      %1214 = vst [vmem:[#allocation3 + $0xa8] sm:$0xff] %v1118
      %1215 = vst [vmem:[#allocation3 + $0xb0] sm:$0xff] %v1119
      %1216 = vst.msk [vmem:[#allocation3 + $0xb8] sm:$0xff] %vm886, %v1120
      %1217 = vst [vmem:[#allocation3 + $0xc0] sm:$0xff] %v1121
      %1218 = vst [vmem:[#allocation3 + $0xc8] sm:$0xff] %v1122
      %1219 = vst.msk [vmem:[#allocation3 + $0xd0] sm:$0xff] %vm886, %v1123
      %1220 = vst [vmem:[#allocation3 + $0xd8] sm:$0xff] %v1124
      %1221 = vst [vmem:[#allocation3 + $0xe0] sm:$0xff] %v1125
      %1222 = vst.msk [vmem:[#allocation3 + $0xe8] sm:$0xff] %vm886, %v1126
      %1223 = vst [vmem:[#allocation3 + $0xf0] sm:$0xff] %v1127
      %1224 = vst [vmem:[#allocation3 + $0xf8] sm:$0xff] %v1128
      %1225 = vst.msk [vmem:[#allocation3 + $0x100] sm:$0xff] %vm886, %v1129
      %1226 = vst [vmem:[#allocation3 + $0x108] sm:$0xff] %v1130
      %1227 = vst [vmem:[#allocation3 + $0x110] sm:$0xff] %v1131
      %1228 = vst.msk [vmem:[#allocation3 + $0x118] sm:$0xff] %vm886, %v1132
      %1229 = vst [vmem:[#allocation3 + $0x120] sm:$0xff] %v1133
      %1230 = vst [vmem:[#allocation3 + $0x128] sm:$0xff] %v1134
      %1231 = vst.msk [vmem:[#allocation3 + $0x130] sm:$0xff] %vm886, %v1135
      %1232 = vst [vmem:[#allocation3 + $0x138] sm:$0xff] %v1136
      %1233 = vst [vmem:[#allocation3 + $0x140] sm:$0xff] %v1137
      %1234 = vst.msk [vmem:[#allocation3 + $0x148] sm:$0xff] %vm886, %v1138
      %1235 = vst [vmem:[#allocation3 + $0x150] sm:$0xff] %v1139
      %1236 = vst [vmem:[#allocation3 + $0x158] sm:$0xff] %v1140
      %1237 = vst.msk [vmem:[#allocation3 + $0x160] sm:$0xff] %vm886, %v1141
      %1238 = vst [vmem:[#allocation3 + $0x168] sm:$0xff] %v1142
      %1239 = vst [vmem:[#allocation3 + $0x170] sm:$0xff] %v1143
      %1240 = vst.msk [vmem:[#allocation3 + $0x178] sm:$0xff] %vm886, %v1144
      %1241 = vst [vmem:[#allocation3 + $0x180] sm:$0xff] %v1145
      %1242 = vst [vmem:[#allocation3 + $0x188] sm:$0xff] %v1146
      %1243 = vst.msk [vmem:[#allocation3 + $0x190] sm:$0xff] %vm886, %v1147
      %1244 = vst [vmem:[#allocation3 + $0x198] sm:$0xff] %v1148
      %1245 = vst [vmem:[#allocation3 + $0x1a0] sm:$0xff] %v1149
      %1246 = vst.msk [vmem:[#allocation3 + $0x1a8] sm:$0xff] %vm886, %v1150
      %1247 = vst [vmem:[#allocation3 + $0x1b0] sm:$0xff] %v1151
      %1248 = vst [vmem:[#allocation3 + $0x1b8] sm:$0xff] %v1152
      %1249 = vst.msk [vmem:[#allocation3 + $0x1c0] sm:$0xff] %vm886, %v1153
      %1250 = vst [vmem:[#allocation3 + $0x1c8] sm:$0xff] %v1154
      %1251 = vst [vmem:[#allocation3 + $0x1d0] sm:$0xff] %v1155
      %1252 = vst.msk [vmem:[#allocation3 + $0x1d8] sm:$0xff] %vm886, %v1156
      %1253 = vst [vmem:[#allocation3 + $0x1e0] sm:$0xff] %v1157
      %1254 = vst [vmem:[#allocation3 + $0x1e8] sm:$0xff] %v1158
      %1255 = vst.msk [vmem:[#allocation3 + $0x1f0] sm:$0xff] %vm886, %v1159
      %1256 = vst [vmem:[#allocation3 + $0x1f8] sm:$0xff] %v1160
      %1257 = vst [vmem:[#allocation3 + $0x200] sm:$0xff] %v1161
      %1258 = vst.msk [vmem:[#allocation3 + $0x208] sm:$0xff] %vm886, %v1162
      %1259 = vst [vmem:[#allocation3 + $0x210] sm:$0xff] %v1163
      %1260 = vst [vmem:[#allocation3 + $0x218] sm:$0xff] %v1164
      %1261 = vst.msk [vmem:[#allocation3 + $0x220] sm:$0xff] %vm886, %v1165
      %1262 = vst [vmem:[#allocation3 + $0x228] sm:$0xff] %v1166
      %1263 = vst [vmem:[#allocation3 + $0x230] sm:$0xff] %v1167
      %1264 = vst.msk [vmem:[#allocation3 + $0x238] sm:$0xff] %vm886, %v1168
      %1265 = vst [vmem:[#allocation3 + $0x240] sm:$0xff] %v1169
      %1266 = vst [vmem:[#allocation3 + $0x248] sm:$0xff] %v1170
      %1267 = vst.msk [vmem:[#allocation3 + $0x250] sm:$0xff] %vm886, %v1171
      %1268 = vst [vmem:[#allocation3 + $0x258] sm:$0xff] %v1172
      %1269 = vst [vmem:[#allocation3 + $0x260] sm:$0xff] %v1173
      %1270 = vst.msk [vmem:[#allocation3 + $0x268] sm:$0xff] %vm886, %v1174
      %1271 = vst [vmem:[#allocation3 + $0x270] sm:$0xff] %v1175
      %1272 = vst [vmem:[#allocation3 + $0x278] sm:$0xff] %v1176
      %1273 = vst.msk [vmem:[#allocation3 + $0x280] sm:$0xff] %vm886, %v1177
      %1274 = vst [vmem:[#allocation3 + $0x288] sm:$0xff] %v1178
      %1275 = vst [vmem:[#allocation3 + $0x290] sm:$0xff] %v1179
      %1276 = vst.msk [vmem:[#allocation3 + $0x298] sm:$0xff] %vm886, %v1180
      %1277 = vst [vmem:[#allocation3 + $0x2a0] sm:$0xff] %v1181
      %1278 = vst [vmem:[#allocation3 + $0x2a8] sm:$0xff] %v1182
      %1279 = vst.msk [vmem:[#allocation3 + $0x2b0] sm:$0xff] %vm886, %v1183
      %1280 = vst [vmem:[#allocation3 + $0x2b8] sm:$0xff] %v1184
      %1281 = vst [vmem:[#allocation3 + $0x2c0] sm:$0xff] %v1185
      %1282 = vst.msk [vmem:[#allocation3 + $0x2c8] sm:$0xff] %vm886, %v1186
      %1283 = vst [vmem:[#allocation3 + $0x2d0] sm:$0xff] %v1187
      %1284 = vst [vmem:[#allocation3 + $0x2d8] sm:$0xff] %v1188
      %1285 = vst.msk [vmem:[#allocation3 + $0x2e0] sm:$0xff] %vm886, %v1189
      %1286 = vst [vmem:[#allocation3 + $0x2e8] sm:$0xff] %v1190
      %1287 = vst [vmem:[#allocation3 + $0x2f0] sm:$0xff] %v1191
      %1288 = vst.msk [vmem:[#allocation3 + $0x2f8] sm:$0xff] %vm886, %v1192
    $region21: #{_conv_jit.1} parent=1 // pred_fallthru
      _
    // Predicated region
    $region22: #{_conv_jit.1} parent=1 // pred_check
      _
    $region23: #{_conv_jit.1} parent=1 // pred_check_branch
      %1290 = sbr.rel (0) target = $region25
    $region24: #{_conv_jit.1} parent=1 // pred_region
      %s1292 = ssub.s32 12288, 12288
      %1293 = vsyncadd [#allocation4], %s1292
      %s1294 = sshll.u32 [#allocation3], 4
      %s1295 = int_to_ptr.vmem [resolvable:$true] %s1294
      %1300 = dma.vmem_to_hbm [thread:$0]  %s1295, 12288, %s3, [#allocation4], 384, 384, 24
    $region25: #{_conv_jit.1} parent=1 // pred_fallthru
      _
    // Predicated region
    $region26: #{_conv_jit.1} parent=1 // pred_check
      _
    $region27: #{_conv_jit.1} parent=1 // pred_check_branch
      %1302 = sbr.rel (0) target = $region29
    $region28: #{_conv_jit.1} parent=1 // pred_region
      %1303 = dma.done [#allocation4], 12288
    $region29: #{_conv_jit.1} parent=1 // pred_fallthru
      _
    %1304 = vsyncpa [#allocation4], 1

</llo_original>
